<compile_context>
chip_gen: v7x
topology: tpu7x:2x2x1
jax: 0.10.0
libtpu: 0.0.40
codegen_flags: <defaults>
</compile_context>

<pallas_src>
import functools

import jax
import jax.numpy as jnp
import numpy as np
from jax.experimental import pallas as pl
from jax.experimental.pallas import tpu as pltpu

LN_EPS = 1e-5
_HIGHEST = jax.lax.Precision.HIGHEST
_DEFAULT = jax.lax.Precision.DEFAULT


def _round_up(a: int, b: int) -> int:
    return -(-a // b) * b


# ---------------------------------------------------------------------------
# Interpolation matrix for F.interpolate(mode='linear', align_corners=True)
# ---------------------------------------------------------------------------
def make_interp_matrix(in_size: int, out_size: int, dtype=np.float32):
    """W such that x @ W == F.interpolate(x[:,None,:], out_size, 'linear',
    align_corners=True)[:,0,:] for x of shape (N, in_size)."""
    if in_size == out_size:
        return np.eye(in_size, dtype=dtype)
    cols = np.arange(out_size)
    if out_size == 1:
        pos = np.zeros((1,), dtype=np.float64)
    else:
        pos = cols * (in_size - 1) / (out_size - 1)
    lo = np.clip(np.floor(pos).astype(np.int64), 0, in_size - 1)
    hi = np.minimum(lo + 1, in_size - 1)
    w_hi = pos - lo
    w_lo = 1.0 - w_hi
    W = np.zeros((in_size, out_size), dtype=np.float64)
    W[lo, cols] += w_lo
    W[hi, cols] += w_hi
    return W.astype(dtype)


# ---------------------------------------------------------------------------
# Pallas kernel: (gated, resampled) skip + x -> LayerNorm, fully fused.
# ---------------------------------------------------------------------------
def _addnorm_kernel(*refs, eps, folded, interp_precision, stats_precision):
    if folded:
        x_ref, skip_ref, w_ref, avg_ref, gamma_ref, beta_ref, o_ref = refs
    else:
        x_ref, skip_ref, w_ref, gamma_ref, beta_ref, o_ref = refs
        avg_ref = None

    # Resample skip along the feature dim (trainable-add gate already folded
    # into w) on the MXU.  bf16 operands take the native single-pass path.
    lhs = skip_ref[...]
    if lhs.dtype != w_ref.dtype:
        lhs = lhs.astype(w_ref.dtype)
    skip_rs = jnp.dot(lhs, w_ref[...], precision=interp_precision,
                      preferred_element_type=jnp.float32)
    s = x_ref[...].astype(jnp.float32) + skip_rs

    if folded:
        # k logical rows are packed on the lane axis; per-segment LayerNorm
        # statistics via a block-diagonal averaging matmul.  E[s] and E[s^2]
        # are two independent matmuls (no serial MXU->VPU->MXU chain).
        avg = avg_ref[...]
        mean = jnp.dot(s, avg, precision=stats_precision,
                       preferred_element_type=jnp.float32)
        ex2 = jnp.dot(s * s, avg, precision=stats_precision,
                      preferred_element_type=jnp.float32)
        var = jnp.maximum(ex2 - mean * mean, 0.0)
        c = s - mean
    else:
        mean = jnp.mean(s, axis=-1, keepdims=True)
        c = s - mean
        var = jnp.mean(c * c, axis=-1, keepdims=True)

    inv = jax.lax.rsqrt(var + eps)
    o_ref[...] = (c * inv * gamma_ref[...] + beta_ref[...]).astype(o_ref.dtype)


# ---------------------------------------------------------------------------
# Wrapper
# ---------------------------------------------------------------------------
def add_norm(x, skip, mask, ln_weight, ln_bias, *, tile_rows=1024,
             stats_precision=_HIGHEST):
    """x: (B, T, input_size), skip: (B, T, skip_size) -> (B, T, input_size)."""
    B, T, D = x.shape
    S = skip.shape[-1]
    N = B * T

    # Lane-folding factor: pack k rows onto the 128-wide lane axis when the
    # feature dim is lane-sparse, D divides 128 and no padding would be
    # needed (N % k == 0).  Otherwise fall back to the un-folded layout.
    k = 128 // D if (D < 128 and 128 % D == 0) else 1
    if k > 1 and N % k != 0:
        k = 1
    De, Se = k * D, k * S
    nf = N // k

    # Contiguous reshapes only (free / bitcast): no padded copies of x/skip.
    x2 = x.reshape(nf, De)
    skip2 = skip.reshape(nf, Se)

    itx = x.dtype.itemsize
    its = skip.dtype.itemsize

    def _io_bytes(t):  # double-buffered x + skip + out tiles
        return 2 * t * (De * itx + Se * its + De * itx)

    # Row tile: large (HBM roofline), multiple of 32 sublanes when tiling
    # (f32/bf16/int8 packing).  A block equal to the full row count is always
    # layout-legal, so small inputs get a single grid step.
    tm = max(32, (max(int(tile_rows), 32) // 32) * 32)
    if tm >= nf:
        tm = nf
    # Keep the double-buffered working set comfortably under the 32 MiB
    # scoped-VMEM default (and v7x's 64 MiB physical VMEM).
    while tm > 64 and _io_bytes(tm) > (24 << 20):
        tm = max(64, ((tm // 2) // 32) * 32)
    grid = (pl.cdiv(nf, tm),)   # ragged nf handled by the partial edge block

    # Interpolation matrix with the trainable-add gate folded in, replicated
    # block-diagonally over the k folded lane segments.
    gate = 2.0 * jax.nn.sigmoid(mask.astype(jnp.float32))                 # (D,)
    interp = jnp.asarray(make_interp_matrix(S, D)) * gate[None, :]        # (S, D)
    w = jnp.kron(jnp.eye(k, dtype=jnp.float32), interp)                   # (Se, De)

    # bf16 inputs stream natively through the MXU (single pass); f32 inputs
    # use HIGHEST so resampling matches f32 PyTorch numerics.
    if x.dtype == jnp.bfloat16 and skip.dtype == jnp.bfloat16:
        w = w.astype(jnp.bfloat16)
        interp_precision = _DEFAULT
    else:
        interp_precision = _HIGHEST

    gamma = jnp.tile(ln_weight.astype(jnp.float32).reshape(-1), k)[None, :]
    beta = jnp.tile(ln_bias.astype(jnp.float32).reshape(-1), k)[None, :]

    inputs = [x2, skip2, w]
    in_specs = [
        pl.BlockSpec((tm, De), lambda i: (i, 0)),   # x rows
        pl.BlockSpec((tm, Se), lambda i: (i, 0)),   # skip rows
        pl.BlockSpec((Se, De), lambda i: (0, 0)),   # gated interp (VMEM-resident)
    ]
    const_bytes = w.size * w.dtype.itemsize + 2 * De * 4
    if k > 1:
        # Block-diagonal per-segment averaging matrix for LN statistics.
        avg = jnp.asarray(np.kron(np.eye(k), np.full((D, D), 1.0 / D)),
                          dtype=jnp.float32)                              # (De, De)
        inputs.append(avg)
        in_specs.append(pl.BlockSpec((De, De), lambda i: (0, 0)))
        const_bytes += De * De * 4
    inputs += [gamma, beta]
    in_specs += [pl.BlockSpec((1, De), lambda i: (0, 0)),
                 pl.BlockSpec((1, De), lambda i: (0, 0))]

    kernel = functools.partial(_addnorm_kernel, eps=LN_EPS, folded=(k > 1),
                               interp_precision=interp_precision,
                               stats_precision=stats_precision)

    vmem_limit = int(min(max(_io_bytes(tm) + 2 * const_bytes + (2 << 20),
                             16 << 20), 64 << 20))

    out = pl.pallas_call(
        kernel,
        out_shape=jax.ShapeDtypeStruct((nf, De), x.dtype),
        grid_spec=pltpu.PrefetchScalarGridSpec(
            num_scalar_prefetch=0,
            grid=grid,
            in_specs=in_specs,
            out_specs=pl.BlockSpec((tm, De), lambda i: (i, 0)),
        ),
        compiler_params=pltpu.CompilerParams(
            dimension_semantics=("parallel",),
            vmem_limit_bytes=vmem_limit,
        ),
    )(*inputs)

    return out.reshape(B, T, D)   # free reshape, no slicing


# ---------------------------------------------------------------------------
# Pure-JAX reference for verification (matches the PyTorch module)
# ---------------------------------------------------------------------------
def add_norm_ref(x, skip, mask, ln_weight, ln_bias):
    D = x.shape[-1]
    S = skip.shape[-1]
    x = x.astype(jnp.float32)
    skip = skip.astype(jnp.float32)
    interp = jnp.asarray(make_interp_matrix(S, D))
    skip_rs = jnp.dot(skip.reshape(-1, S), interp,
                      precision=_HIGHEST).reshape(x.shape[:-1] + (D,))
    skip_rs = skip_rs * (jax.nn.sigmoid(mask.astype(jnp.float32)) * 2.0)
    s = x + skip_rs
    mean = jnp.mean(s, axis=-1, keepdims=True)
    var = jnp.mean((s - mean) ** 2, axis=-1, keepdims=True)
    return ((s - mean) * jax.lax.rsqrt(var + LN_EPS)
            * ln_weight.astype(jnp.float32) + ln_bias.astype(jnp.float32))


def _check(out, ref, rtol, atol):
    np.testing.assert_allclose(np.asarray(jnp.asarray(out, dtype=jnp.float32)),
                               np.asarray(jnp.asarray(ref, dtype=jnp.float32)),
                               rtol=rtol, atol=atol)


# ---------------------------------------------------------------------------
if __name__ == "__main__":
    key = jax.random.PRNGKey(0)

    # Case 1: lane-folded path (D=32 -> k=4), parameters at PyTorch init.
    B, T, D, S = 2, 8, 32, 16
    k1, k2, key = jax.random.split(key, 3)
    x = jax.random.normal(k1, (B, T, D), dtype=jnp.float32)
    skip = jax.random.normal(k2, (B, T, S), dtype=jnp.float32)
    mask = jnp.zeros((D,), dtype=jnp.float32)
    gamma = jnp.ones((D,), dtype=jnp.float32)
    beta = jnp.zeros((D,), dtype=jnp.float32)
    out = jax.block_until_ready(add_norm(x, skip, mask, gamma, beta))
    _check(out, add_norm_ref(x, skip, mask, gamma, beta), 1e-5, 2e-5)

    # Case 2: un-folded path (D=128), ragged N=B*T=14, trained params.
    B, T, D, S = 2, 7, 128, 64
    k1, k2, k3, k4, k5, key = jax.random.split(key, 6)
    x = jax.random.normal(k1, (B, T, D), dtype=jnp.float32)
    skip = jax.random.normal(k2, (B, T, S), dtype=jnp.float32)
    mask = 0.1 * jax.random.normal(k3, (D,), dtype=jnp.float32)
    gamma = 1.0 + 0.1 * jax.random.normal(k4, (D,), dtype=jnp.float32)
    beta = 0.1 * jax.random.normal(k5, (D,), dtype=jnp.float32)
    out = jax.block_until_ready(add_norm(x, skip, mask, gamma, beta))
    _check(out, add_norm_ref(x, skip, mask, gamma, beta), 1e-5, 2e-5)

    # Case 3: folded (D=64 -> k=2), multi-tile grid with a ragged partial
    # last block (nf=105 folded rows, tm=64 -> grid=2, last tile 41 rows):
    # exercises the in-kernel ragged-N path (no pad, no output slice).
    B, T, D, S = 3, 70, 64, 32
    k1, k2, k3, k4, k5, key = jax.random.split(key, 6)
    x = jax.random.normal(k1, (B, T, D), dtype=jnp.float32)
    skip = jax.random.normal(k2, (B, T, S), dtype=jnp.float32)
    mask = 0.1 * jax.random.normal(k3, (D,), dtype=jnp.float32)
    gamma = 1.0 + 0.1 * jax.random.normal(k4, (D,), dtype=jnp.float32)
    beta = 0.1 * jax.random.normal(k5, (D,), dtype=jnp.float32)
    out = jax.block_until_ready(
        add_norm(x, skip, mask, gamma, beta, tile_rows=64))
    _check(out, add_norm_ref(x, skip, mask, gamma, beta), 1e-5, 2e-5)

    # Case 4: bf16 streaming (halved HBM bytes, native bf16 MXU resample).
    B, T, D, S = 2, 16, 32, 32
    k1, k2, k3, k4, k5, key = jax.random.split(key, 6)
    x = jax.random.normal(k1, (B, T, D), dtype=jnp.float32).astype(jnp.bfloat16)
    skip = jax.random.normal(k2, (B, T, S), dtype=jnp.float32).astype(jnp.bfloat16)
    mask = 0.1 * jax.random.normal(k3, (D,), dtype=jnp.float32)
    gamma = 1.0 + 0.1 * jax.random.normal(k4, (D,), dtype=jnp.float32)
    beta = 0.1 * jax.random.normal(k5, (D,), dtype=jnp.float32)
    out = jax.block_until_ready(add_norm(x, skip, mask, gamma, beta))
    _check(out, add_norm_ref(x, skip, mask, gamma, beta), 2e-2, 2e-2)

    print("KERNEL_OK")
</pallas_src>

<mosaic_0001>
module attributes {stable_mosaic.version = 11 : i64} {
  func.func @_addnorm_kernel(%arg0: i32, %arg1: memref<4x128xf32, #tpu.memory_space<vmem>>, %arg2: memref<4x64xf32, #tpu.memory_space<vmem>>, %arg3: memref<64x128xf32, #tpu.memory_space<vmem>>, %arg4: memref<128x128xf32, #tpu.memory_space<vmem>>, %arg5: memref<1x128xf32, #tpu.memory_space<vmem>>, %arg6: memref<1x128xf32, #tpu.memory_space<vmem>>, %arg7: memref<4x128xf32, #tpu.memory_space<vmem>>) attributes {dimension_semantics = [#tpu.dimension_semantics<parallel>], iteration_bounds = array<i64: 1>, scalar_prefetch = 0 : i64, scratch_operands = 0 : i64, tpu.core_type = #tpu.core_type<tc>, window_params = [{transform_indices = @transform_0, window_bounds = array<i64: 4, 128>}, {transform_indices = @transform_1, window_bounds = array<i64: 4, 64>}, {pipeline_mode = #tpu.pipeline_mode<synchronous>, transform_indices = @transform_2, window_bounds = array<i64: 64, 128>}, {pipeline_mode = #tpu.pipeline_mode<synchronous>, transform_indices = @transform_3, window_bounds = array<i64: 128, 128>}, {pipeline_mode = #tpu.pipeline_mode<synchronous>, transform_indices = @transform_4, window_bounds = array<i64: 1, 128>}, {pipeline_mode = #tpu.pipeline_mode<synchronous>, transform_indices = @transform_5, window_bounds = array<i64: 1, 128>}, {transform_indices = @transform_6, window_bounds = array<i64: 4, 128>}]} {
    %c0 = arith.constant 0 : index
    %c0_0 = arith.constant 0 : index
    %0 = vector.load %arg2[%c0, %c0_0] : memref<4x64xf32, #tpu.memory_space<vmem>>, vector<4x64xf32>
    %c0_1 = arith.constant 0 : index
    %c0_2 = arith.constant 0 : index
    %1 = vector.load %arg3[%c0_1, %c0_2] : memref<64x128xf32, #tpu.memory_space<vmem>>, vector<64x128xf32>
    %cst = arith.constant dense<0.000000e+00> : vector<4x128xf32>
    %2 = tpu.matmul %0, %1, %cst {dimension_numbers = #tpu.dot_dimension_numbers<[1], [0], [0], [1], [0, 0, 1, 1], [], []>, precision = #tpu.contract_precision<fp32>} : vector<4x64xf32>, vector<64x128xf32>, vector<4x128xf32> -> vector<4x128xf32>
    %c0_3 = arith.constant 0 : index
    %c0_4 = arith.constant 0 : index
    %3 = vector.load %arg1[%c0_3, %c0_4] : memref<4x128xf32, #tpu.memory_space<vmem>>, vector<4x128xf32>
    %4 = arith.addf %3, %2 : vector<4x128xf32>
    %c0_5 = arith.constant 0 : index
    %c0_6 = arith.constant 0 : index
    %5 = vector.load %arg4[%c0_5, %c0_6] : memref<128x128xf32, #tpu.memory_space<vmem>>, vector<128x128xf32>
    %cst_7 = arith.constant dense<0.000000e+00> : vector<4x128xf32>
    %6 = tpu.matmul %4, %5, %cst_7 {dimension_numbers = #tpu.dot_dimension_numbers<[1], [0], [0], [1], [0, 0, 1, 1], [], []>, precision = #tpu.contract_precision<fp32>} : vector<4x128xf32>, vector<128x128xf32>, vector<4x128xf32> -> vector<4x128xf32>
    %7 = arith.mulf %4, %4 : vector<4x128xf32>
    %cst_8 = arith.constant dense<0.000000e+00> : vector<4x128xf32>
    %8 = tpu.matmul %7, %5, %cst_8 {dimension_numbers = #tpu.dot_dimension_numbers<[1], [0], [0], [1], [0, 0, 1, 1], [], []>, precision = #tpu.contract_precision<fp32>} : vector<4x128xf32>, vector<128x128xf32>, vector<4x128xf32> -> vector<4x128xf32>
    %9 = arith.mulf %6, %6 : vector<4x128xf32>
    %10 = arith.subf %8, %9 : vector<4x128xf32>
    %cst_9 = arith.constant 0.000000e+00 : f32
    %11 = vector.broadcast %cst_9 : f32 to vector<4x128xf32>
    %12 = arith.maximumf %10, %11 : vector<4x128xf32>
    %13 = arith.subf %4, %6 : vector<4x128xf32>
    %cst_10 = arith.constant 9.99999974E-6 : f32
    %14 = vector.broadcast %cst_10 : f32 to vector<4x128xf32>
    %15 = arith.addf %12, %14 : vector<4x128xf32>
    %16 = math.rsqrt %15 : vector<4x128xf32>
    %17 = arith.mulf %13, %16 : vector<4x128xf32>
    %c0_11 = arith.constant 0 : index
    %c0_12 = arith.constant 0 : index
    %18 = vector.load %arg5[%c0_11, %c0_12] : memref<1x128xf32, #tpu.memory_space<vmem>>, vector<1x128xf32>
    %19 = vector.broadcast %18 : vector<1x128xf32> to vector<4x128xf32>
    %20 = arith.mulf %17, %19 : vector<4x128xf32>
    %c0_13 = arith.constant 0 : index
    %c0_14 = arith.constant 0 : index
    %21 = vector.load %arg6[%c0_13, %c0_14] : memref<1x128xf32, #tpu.memory_space<vmem>>, vector<1x128xf32>
    %22 = vector.broadcast %21 : vector<1x128xf32> to vector<4x128xf32>
    %23 = arith.addf %20, %22 : vector<4x128xf32>
    %c0_15 = arith.constant 0 : index
    %c0_16 = arith.constant 0 : index
    %24 = vector.load %arg7[%c0_15, %c0_16] : memref<4x128xf32, #tpu.memory_space<vmem>>, vector<4x128xf32>
    tpu.vector_store %arg7[%c0_15, %c0_16], %23 {strides = array<i32>} : memref<4x128xf32, #tpu.memory_space<vmem>>, vector<4x128xf32>,
    return
  }
  func.func @transform_0(%arg0: i32) -> (i32, i32) {
    %c0_i32 = arith.constant 0 : i32
    %c0_i32_0 = arith.constant 0 : i32
    return %arg0, %c0_i32 : i32, i32
  }
  func.func @transform_1(%arg0: i32) -> (i32, i32) {
    %c0_i32 = arith.constant 0 : i32
    %c0_i32_0 = arith.constant 0 : i32
    return %arg0, %c0_i32 : i32, i32
  }
  func.func @transform_2(%arg0: i32) -> (i32, i32) {
    %c0_i32 = arith.constant 0 : i32
    %c0_i32_0 = arith.constant 0 : i32
    %c0_i32_1 = arith.constant 0 : i32
    return %c0_i32, %c0_i32_0 : i32, i32
  }
  func.func @transform_3(%arg0: i32) -> (i32, i32) {
    %c0_i32 = arith.constant 0 : i32
    %c0_i32_0 = arith.constant 0 : i32
    %c0_i32_1 = arith.constant 0 : i32
    return %c0_i32, %c0_i32_0 : i32, i32
  }
  func.func @transform_4(%arg0: i32) -> (i32, i32) {
    %c0_i32 = arith.constant 0 : i32
    %c0_i32_0 = arith.constant 0 : i32
    %c0_i32_1 = arith.constant 0 : i32
    return %c0_i32, %c0_i32_0 : i32, i32
  }
  func.func @transform_5(%arg0: i32) -> (i32, i32) {
    %c0_i32 = arith.constant 0 : i32
    %c0_i32_0 = arith.constant 0 : i32
    %c0_i32_1 = arith.constant 0 : i32
    return %c0_i32, %c0_i32_0 : i32, i32
  }
  func.func @transform_6(%arg0: i32) -> (i32, i32) {
    %c0_i32 = arith.constant 0 : i32
    %c0_i32_0 = arith.constant 0 : i32
    return %arg0, %c0_i32 : i32, i32
  }
}

</mosaic_0001>

<llo_original>
// kernel: tpu_custom_call.1
$region0: #{tpu_custom_call.1}
  #allocation0 [shape = 'u32[]', space=smem, size = 0x4, offset = 0x4, fixed_abs, tag = 'smem constant byte address 0x4 - core index']
  #allocation1 [shape = 'u32[144,128]{1,0:T(1,128)}', space=vmem, size = 0x12000, scoped, tag = 'internal scratch']
  %s0 = inlined_call_operand.hbm [shape: f32[4,128], index: 0, kind: input, shape index: {}]
  %s1 = inlined_call_operand.hbm [shape: f32[4,64], index: 1, kind: input, shape index: {}]
  %s2 = inlined_call_operand.hbm [shape: f32[64,128], index: 2, kind: input, shape index: {}]
  %s3 = inlined_call_operand.hbm [shape: f32[128,128], index: 3, kind: input, shape index: {}]
  %s4 = inlined_call_operand.vmem [shape: f32[1,128], index: 4, kind: input, shape index: {}]
  %s5 = inlined_call_operand.vmem [shape: f32[1,128], index: 5, kind: input, shape index: {}]
  %s6 = inlined_call_operand.hbm [shape: f32[4,128], index: 6, kind: output, shape index: {}]
  %s7 = sld [smem:[#allocation0]]
  $region50: #{tpu_custom_call.1} parent=0
    _
  %s9 = ssub.s32 1, %s7
  %s10 = scalar_select 0, %s9, %s7
  $region1: #{tpu_custom_call.1} parent=0
    #allocation2 [shape = 'u8[2048]{0}', space=vmem, size = 0x800, scoped, tag = 'input window, operand 0, single buffered']
    #allocation3 [shape = 's32[1]{0}', space=sflag, size = 0x4, scoped, tag = 'scoped memory for tpu_custom_call.1']
    #allocation4 [shape = 's32[1]{0}', space=sflag, size = 0x4, scoped, tag = 'scoped memory for tpu_custom_call.1']
    #allocation5 [shape = 'u8[2048]{0}', space=vmem, size = 0x800, scoped, tag = 'input window, operand 1, single buffered']
    #allocation6 [shape = 's32[1]{0}', space=sflag, size = 0x4, scoped, tag = 'scoped memory for tpu_custom_call.1']
    #allocation7 [shape = 'u8[32768]{0}', space=vmem, size = 0x8000, scoped, tag = 'input window, operand 2, single buffered']
    #allocation8 [shape = 'u8[65536]{0}', space=vmem, size = 0x10000, scoped, tag = 'input window, operand 3, single buffered']
    #allocation9 [shape = 's32[1]{0}', space=sflag, size = 0x4, scoped, tag = 'scoped memory for tpu_custom_call.1']
    #allocation10 [shape = 'u8[2048]{0}', space=vmem, size = 0x800, scoped, tag = 'output window, operand 0, single buffered']
    %11 = vsyncpa [#allocation3], 0
    %12 = vsyncpa [#allocation6], 0
    %13 = vsyncpa [#allocation9], 0
    %14 = vsyncpa [#allocation4], 0
    // Predicated region
    $region2: #{tpu_custom_call.1} parent=1 // pred_check
      _
    $region3: #{tpu_custom_call.1} parent=1 // pred_check_branch
      %16 = sbr.rel (0) target = $region5
    $region4: #{tpu_custom_call.1} parent=1 // pred_region
      %s18 = ssub.s32 64, 64
      %19 = vsyncadd [#allocation3], %s18
      %s21 = sshll.u32 [#allocation2], 4
      %s22 = int_to_ptr.vmem [resolvable:$true] %s21
      %24 = dma.hbm_to_vmem [thread:$0]  %s0, 64, %s22, [#allocation3]
    $region5: #{tpu_custom_call.1} parent=1 // pred_fallthru
      _
    // Predicated region
    $region6: #{tpu_custom_call.1} parent=1 // pred_check
      _
    $region7: #{tpu_custom_call.1} parent=1 // pred_check_branch
      %26 = sbr.rel (0) target = $region9
    $region8: #{tpu_custom_call.1} parent=1 // pred_region
      %s28 = ssub.s32 64, 64
      %29 = vsyncadd [#allocation6], %s28
      %s31 = sshll.u32 [#allocation5], 4
      %s32 = int_to_ptr.vmem [resolvable:$true] %s31
      %34 = dma.hbm_to_vmem [thread:$0]  %s1, 64, %s32, [#allocation6]
    $region9: #{tpu_custom_call.1} parent=1 // pred_fallthru
      _
    // Predicated region
    $region10: #{tpu_custom_call.1} parent=1 // pred_check
      _
    $region11: #{tpu_custom_call.1} parent=1 // pred_check_branch
      %36 = sbr.rel (0) target = $region13
    $region12: #{tpu_custom_call.1} parent=1 // pred_region
      %s38 = ssub.s32 1024, 1024
      %39 = vsyncadd [#allocation6], %s38
      %s40 = sshll.u32 [#allocation7], 4
      %s41 = int_to_ptr.vmem [resolvable:$true] %s40
      %46 = dma.hbm_to_vmem [thread:$0]  %s2, 1024, %s41, [#allocation6], 128, 128, 8
    $region13: #{tpu_custom_call.1} parent=1 // pred_fallthru
      _
    // Predicated region
    $region14: #{tpu_custom_call.1} parent=1 // pred_check
      _
    $region15: #{tpu_custom_call.1} parent=1 // pred_check_branch
      %48 = sbr.rel (0) target = $region17
    $region16: #{tpu_custom_call.1} parent=1 // pred_region
      %s50 = ssub.s32 2048, 2048
      %51 = vsyncadd [#allocation9], %s50
      %s52 = sshll.u32 [#allocation8], 4
      %s53 = int_to_ptr.vmem [resolvable:$true] %s52
      %58 = dma.hbm_to_vmem [thread:$0]  %s3, 2048, %s53, [#allocation9], 128, 128, 8
    $region17: #{tpu_custom_call.1} parent=1 // pred_fallthru
      _
    // Predicated region
    $region18: #{tpu_custom_call.1} parent=1 // pred_check
      _
    $region19: #{tpu_custom_call.1} parent=1 // pred_check_branch
      %60 = sbr.rel (0) target = $region21
    $region20: #{tpu_custom_call.1} parent=1 // pred_region
      _
    $region21: #{tpu_custom_call.1} parent=1 // pred_fallthru
      _
    // Predicated region
    $region22: #{tpu_custom_call.1} parent=1 // pred_check
      _
    $region23: #{tpu_custom_call.1} parent=1 // pred_check_branch
      %62 = sbr.rel (0) target = $region25
    $region24: #{tpu_custom_call.1} parent=1 // pred_region
      _
    $region25: #{tpu_custom_call.1} parent=1 // pred_fallthru
      _
    // Predicated region
    $region26: #{tpu_custom_call.1} parent=1 // pred_check
      _
    $region27: #{tpu_custom_call.1} parent=1 // pred_check_branch
      %64 = sbr.rel (0) target = $region29
    $region28: #{tpu_custom_call.1} parent=1 // pred_region
      %65 = dma.done [#allocation3], 64
    $region29: #{tpu_custom_call.1} parent=1 // pred_fallthru
      _
    // Predicated region
    $region30: #{tpu_custom_call.1} parent=1 // pred_check
      _
    $region31: #{tpu_custom_call.1} parent=1 // pred_check_branch
      %67 = sbr.rel (0) target = $region33
    $region32: #{tpu_custom_call.1} parent=1 // pred_region
      %68 = dma.done [#allocation6], 64
    $region33: #{tpu_custom_call.1} parent=1 // pred_fallthru
      _
    // Predicated region
    $region34: #{tpu_custom_call.1} parent=1 // pred_check
      _
    $region35: #{tpu_custom_call.1} parent=1 // pred_check_branch
      %70 = sbr.rel (0) target = $region37
    $region36: #{tpu_custom_call.1} parent=1 // pred_region
      %71 = dma.done [#allocation6], 1024
    $region37: #{tpu_custom_call.1} parent=1 // pred_fallthru
      _
    // Predicated region
    $region38: #{tpu_custom_call.1} parent=1 // pred_check
      _
    $region39: #{tpu_custom_call.1} parent=1 // pred_check_branch
      %73 = sbr.rel (0) target = $region41
    $region40: #{tpu_custom_call.1} parent=1 // pred_region
      %74 = dma.done [#allocation9], 2048
    $region41: #{tpu_custom_call.1} parent=1 // pred_fallthru
      _
    %v75 = vld [vmem:[#allocation5] sm:$0xf]
    %v76 = vld [vmem:[#allocation7] sm:$0xff]
    %v77 = vld [vmem:[#allocation7 + $0x8] sm:$0xff]
    %v78 = vld [vmem:[#allocation7 + $0x10] sm:$0xff]
    %v79 = vld [vmem:[#allocation7 + $0x18] sm:$0xff]
    %v80 = vld [vmem:[#allocation7 + $0x20] sm:$0xff]
    %v81 = vld [vmem:[#allocation7 + $0x28] sm:$0xff]
    %v82 = vld [vmem:[#allocation7 + $0x30] sm:$0xff]
    %v83 = vld [vmem:[#allocation7 + $0x38] sm:$0xff]
    %vm84 = vcmask 523264
    %v86 = vsel %vm84, %v75, 0
    %88 = vmatprep.subr.mxu0 0.0
    %v89 = vand.u32 %v76, 4294901760
    %90 = vmatpush1.msra.mxu0 %v89
    %91 = vmatprep.subr.mxu0 0.0
    %v92 = vand.u32 %v77, 4294901760
    %93 = vmatpush1.msra.mxu0 %v92
    %94 = vmatprep.subr.mxu0 0.0
    %v95 = vand.u32 %v78, 4294901760
    %96 = vmatpush1.msra.mxu0 %v95
    %97 = vmatprep.subr.mxu0 0.0
    %v98 = vand.u32 %v79, 4294901760
    %99 = vmatpush1.msra.mxu0 %v98
    %100 = vmatprep.subr.mxu0 0.0
    %v101 = vand.u32 %v80, 4294901760
    %102 = vmatpush1.msra.mxu0 %v101
    %103 = vmatprep.subr.mxu0 0.0
    %v104 = vand.u32 %v81, 4294901760
    %105 = vmatpush1.msra.mxu0 %v104
    %106 = vmatprep.subr.mxu0 0.0
    %v107 = vand.u32 %v82, 4294901760
    %108 = vmatpush1.msra.mxu0 %v107
    %109 = vmatprep.subr.mxu0 0.0
    %v110 = vand.u32 %v83, 4294901760
    %111 = vmatpush1.msra.mxu0 %v110
    %112 = vmatprep.subr.mxu0 0.0
    %113 = vmatpush1.msra.mxu0 0.0
    %114 = vmatprep.subr.mxu0 0.0
    %115 = vmatpush1.msra.mxu0 0.0
    %116 = vmatprep.subr.mxu0 0.0
    %117 = vmatpush1.msra.mxu0 0.0
    %118 = vmatprep.subr.mxu0 0.0
    %119 = vmatpush1.msra.mxu0 0.0
    %120 = vmatprep.subr.mxu0 0.0
    %121 = vmatpush1.msra.mxu0 0.0
    %122 = vmatprep.subr.mxu0 0.0
    %123 = vmatpush1.msra.mxu0 0.0
    %124 = vmatprep.subr.mxu0 0.0
    %125 = vmatpush1.msra.mxu0 0.0
    %126 = vmatprep.subr.mxu0 0.0
    %127 = vmatpush1.msra.mxu0 0.0
    %128 = vmatprep.subr.mxu0 0.0
    %129 = vmatpush1.msra.mxu0 0.0
    %130 = vmatprep.subr.mxu0 0.0
    %131 = vmatpush1.msra.mxu0 0.0
    %132 = vmatprep.subr.mxu0 0.0
    %133 = vmatpush1.msra.mxu0 0.0
    %134 = vmatprep.subr.mxu0 0.0
    %135 = vmatpush1.msra.mxu0 0.0
    %136 = vmatprep.subr.mxu0 0.0
    %137 = vmatpush1.msra.mxu0 0.0
    %138 = vmatprep.subr.mxu0 0.0
    %139 = vmatpush1.msra.mxu0 0.0
    %140 = vmatprep.subr.mxu0 0.0
    %141 = vmatpush1.msra.mxu0 0.0
    %142 = vmatprep.subr.mxu0 0.0
    %143 = vmatpush1.msra.mxu0 0.0
    %144 = vmatprep.subr.mxu0 0.0
    %145 = vmatpush1.msra.mxu0 0.0
    %146 = vmatprep.subr.mxu0 0.0
    %147 = vmatpush1.msra.mxu0 0.0
    %148 = vmatprep.subr.mxu0 0.0
    %149 = vmatpush1.msra.mxu0 0.0
    %150 = vmatprep.subr.mxu0 0.0
    %151 = vmatpush1.msra.mxu0 0.0
    %152 = vmatprep.subr.mxu0 0.0
    %153 = vmatpush1.msra.mxu0 0.0
    %154 = vmatprep.subr.mxu0 0.0
    %155 = vmatpush1.msra.mxu0 0.0
    %156 = vmatprep.subr.mxu0 0.0
    %157 = vmatpush1.msra.mxu0 0.0
    %158 = vmatprep.subr.mxu0 0.0
    %159 = vmatpush1.msra.mxu0 0.0
    %160 = vmatprep.mubr.f32.mxu0 0.0
    %v161 = vand.u32 %v86, 4294901760
    %v162 = vsub.f32 %v86, %v161
    %v163 = vand.u32 %v162, 4294901760
    %v164 = vsub.f32 %v162, %v163
    %v165 = vand.u32 %v164, 4294901760
    %166 = vmatmul.mubr.f32.gmra.mrb[0].mxu0 %v165
    %v167 = vpop.f32.mrb[0].mxu0
    %v168 = vadd.f32 0.0, %v167
    %v169 = vpop.f32.mrb[0].mxu0
    %170 = vdwg.mxu0
    %171 = vmatprep.subr.mxu0 0.0
    %v172 = vand.u32 %v76, 4294901760
    %v173 = vsub.f32 %v76, %v172
    %v174 = vand.u32 %v173, 4294901760
    %v175 = vsub.f32 %v173, %v174
    %v176 = vand.u32 %v175, 4294901760
    %177 = vmatpush1.msra.mxu0 %v176
    %178 = vmatprep.subr.mxu0 0.0
    %v179 = vand.u32 %v77, 4294901760
    %v180 = vsub.f32 %v77, %v179
    %v181 = vand.u32 %v180, 4294901760
    %v182 = vsub.f32 %v180, %v181
    %v183 = vand.u32 %v182, 4294901760
    %184 = vmatpush1.msra.mxu0 %v183
    %185 = vmatprep.subr.mxu0 0.0
    %v186 = vand.u32 %v78, 4294901760
    %v187 = vsub.f32 %v78, %v186
    %v188 = vand.u32 %v187, 4294901760
    %v189 = vsub.f32 %v187, %v188
    %v190 = vand.u32 %v189, 4294901760
    %191 = vmatpush1.msra.mxu0 %v190
    %192 = vmatprep.subr.mxu0 0.0
    %v193 = vand.u32 %v79, 4294901760
    %v194 = vsub.f32 %v79, %v193
    %v195 = vand.u32 %v194, 4294901760
    %v196 = vsub.f32 %v194, %v195
    %v197 = vand.u32 %v196, 4294901760
    %198 = vmatpush1.msra.mxu0 %v197
    %199 = vmatprep.subr.mxu0 0.0
    %v200 = vand.u32 %v80, 4294901760
    %v201 = vsub.f32 %v80, %v200
    %v202 = vand.u32 %v201, 4294901760
    %v203 = vsub.f32 %v201, %v202
    %v204 = vand.u32 %v203, 4294901760
    %205 = vmatpush1.msra.mxu0 %v204
    %206 = vmatprep.subr.mxu0 0.0
    %v207 = vand.u32 %v81, 4294901760
    %v208 = vsub.f32 %v81, %v207
    %v209 = vand.u32 %v208, 4294901760
    %v210 = vsub.f32 %v208, %v209
    %v211 = vand.u32 %v210, 4294901760
    %212 = vmatpush1.msra.mxu0 %v211
    %213 = vmatprep.subr.mxu0 0.0
    %v214 = vand.u32 %v82, 4294901760
    %v215 = vsub.f32 %v82, %v214
    %v216 = vand.u32 %v215, 4294901760
    %v217 = vsub.f32 %v215, %v216
    %v218 = vand.u32 %v217, 4294901760
    %219 = vmatpush1.msra.mxu0 %v218
    %220 = vmatprep.subr.mxu0 0.0
    %v221 = vand.u32 %v83, 4294901760
    %v222 = vsub.f32 %v83, %v221
    %v223 = vand.u32 %v222, 4294901760
    %v224 = vsub.f32 %v222, %v223
    %v225 = vand.u32 %v224, 4294901760
    %226 = vmatpush1.msra.mxu0 %v225
    %227 = vmatprep.subr.mxu0 0.0
    %228 = vmatpush1.msra.mxu0 0.0
    %229 = vmatprep.subr.mxu0 0.0
    %230 = vmatpush1.msra.mxu0 0.0
    %231 = vmatprep.subr.mxu0 0.0
    %232 = vmatpush1.msra.mxu0 0.0
    %233 = vmatprep.subr.mxu0 0.0
    %234 = vmatpush1.msra.mxu0 0.0
    %235 = vmatprep.subr.mxu0 0.0
    %236 = vmatpush1.msra.mxu0 0.0
    %237 = vmatprep.subr.mxu0 0.0
    %238 = vmatpush1.msra.mxu0 0.0
    %239 = vmatprep.subr.mxu0 0.0
    %240 = vmatpush1.msra.mxu0 0.0
    %241 = vmatprep.subr.mxu0 0.0
    %242 = vmatpush1.msra.mxu0 0.0
    %243 = vmatprep.subr.mxu0 0.0
    %244 = vmatpush1.msra.mxu0 0.0
    %245 = vmatprep.subr.mxu0 0.0
    %246 = vmatpush1.msra.mxu0 0.0
    %247 = vmatprep.subr.mxu0 0.0
    %248 = vmatpush1.msra.mxu0 0.0
    %249 = vmatprep.subr.mxu0 0.0
    %250 = vmatpush1.msra.mxu0 0.0
    %251 = vmatprep.subr.mxu0 0.0
    %252 = vmatpush1.msra.mxu0 0.0
    %253 = vmatprep.subr.mxu0 0.0
    %254 = vmatpush1.msra.mxu0 0.0
    %255 = vmatprep.subr.mxu0 0.0
    %256 = vmatpush1.msra.mxu0 0.0
    %257 = vmatprep.subr.mxu0 0.0
    %258 = vmatpush1.msra.mxu0 0.0
    %259 = vmatprep.subr.mxu0 0.0
    %260 = vmatpush1.msra.mxu0 0.0
    %261 = vmatprep.subr.mxu0 0.0
    %262 = vmatpush1.msra.mxu0 0.0
    %263 = vmatprep.subr.mxu0 0.0
    %264 = vmatpush1.msra.mxu0 0.0
    %265 = vmatprep.subr.mxu0 0.0
    %266 = vmatpush1.msra.mxu0 0.0
    %267 = vmatprep.subr.mxu0 0.0
    %268 = vmatpush1.msra.mxu0 0.0
    %269 = vmatprep.subr.mxu0 0.0
    %270 = vmatpush1.msra.mxu0 0.0
    %271 = vmatprep.subr.mxu0 0.0
    %272 = vmatpush1.msra.mxu0 0.0
    %273 = vmatprep.subr.mxu0 0.0
    %274 = vmatpush1.msra.mxu0 0.0
    %275 = vmatprep.mubr.f32.mxu0 0.0
    %v276 = vand.u32 %v86, 4294901760
    %277 = vmatmul.mubr.f32.gmra.mrb[0].mxu0 %v276
    %v278 = vpop.f32.mrb[0].mxu0
    %v279 = vadd.f32 %v168, %v278
    %v280 = vpop.f32.mrb[0].mxu0
    %281 = vdwg.mxu0
    %282 = vmatprep.subr.mxu0 0.0
    %v283 = vand.u32 %v76, 4294901760
    %v284 = vsub.f32 %v76, %v283
    %285 = vmatpush1.msra.mxu0 %v284
    %286 = vmatprep.subr.mxu0 0.0
    %v287 = vand.u32 %v77, 4294901760
    %v288 = vsub.f32 %v77, %v287
    %289 = vmatpush1.msra.mxu0 %v288
    %290 = vmatprep.subr.mxu0 0.0
    %v291 = vand.u32 %v78, 4294901760
    %v292 = vsub.f32 %v78, %v291
    %293 = vmatpush1.msra.mxu0 %v292
    %294 = vmatprep.subr.mxu0 0.0
    %v295 = vand.u32 %v79, 4294901760
    %v296 = vsub.f32 %v79, %v295
    %297 = vmatpush1.msra.mxu0 %v296
    %298 = vmatprep.subr.mxu0 0.0
    %v299 = vand.u32 %v80, 4294901760
    %v300 = vsub.f32 %v80, %v299
    %301 = vmatpush1.msra.mxu0 %v300
    %302 = vmatprep.subr.mxu0 0.0
    %v303 = vand.u32 %v81, 4294901760
    %v304 = vsub.f32 %v81, %v303
    %305 = vmatpush1.msra.mxu0 %v304
    %306 = vmatprep.subr.mxu0 0.0
    %v307 = vand.u32 %v82, 4294901760
    %v308 = vsub.f32 %v82, %v307
    %309 = vmatpush1.msra.mxu0 %v308
    %310 = vmatprep.subr.mxu0 0.0
    %v311 = vand.u32 %v83, 4294901760
    %v312 = vsub.f32 %v83, %v311
    %313 = vmatpush1.msra.mxu0 %v312
    %314 = vmatprep.subr.mxu0 0.0
    %315 = vmatpush1.msra.mxu0 0.0
    %316 = vmatprep.subr.mxu0 0.0
    %317 = vmatpush1.msra.mxu0 0.0
    %318 = vmatprep.subr.mxu0 0.0
    %319 = vmatpush1.msra.mxu0 0.0
    %320 = vmatprep.subr.mxu0 0.0
    %321 = vmatpush1.msra.mxu0 0.0
    %322 = vmatprep.subr.mxu0 0.0
    %323 = vmatpush1.msra.mxu0 0.0
    %324 = vmatprep.subr.mxu0 0.0
    %325 = vmatpush1.msra.mxu0 0.0
    %326 = vmatprep.subr.mxu0 0.0
    %327 = vmatpush1.msra.mxu0 0.0
    %328 = vmatprep.subr.mxu0 0.0
    %329 = vmatpush1.msra.mxu0 0.0
    %330 = vmatprep.subr.mxu0 0.0
    %331 = vmatpush1.msra.mxu0 0.0
    %332 = vmatprep.subr.mxu0 0.0
    %333 = vmatpush1.msra.mxu0 0.0
    %334 = vmatprep.subr.mxu0 0.0
    %335 = vmatpush1.msra.mxu0 0.0
    %336 = vmatprep.subr.mxu0 0.0
    %337 = vmatpush1.msra.mxu0 0.0
    %338 = vmatprep.subr.mxu0 0.0
    %339 = vmatpush1.msra.mxu0 0.0
    %340 = vmatprep.subr.mxu0 0.0
    %341 = vmatpush1.msra.mxu0 0.0
    %342 = vmatprep.subr.mxu0 0.0
    %343 = vmatpush1.msra.mxu0 0.0
    %344 = vmatprep.subr.mxu0 0.0
    %345 = vmatpush1.msra.mxu0 0.0
    %346 = vmatprep.subr.mxu0 0.0
    %347 = vmatpush1.msra.mxu0 0.0
    %348 = vmatprep.subr.mxu0 0.0
    %349 = vmatpush1.msra.mxu0 0.0
    %350 = vmatprep.subr.mxu0 0.0
    %351 = vmatpush1.msra.mxu0 0.0
    %352 = vmatprep.subr.mxu0 0.0
    %353 = vmatpush1.msra.mxu0 0.0
    %354 = vmatprep.subr.mxu0 0.0
    %355 = vmatpush1.msra.mxu0 0.0
    %356 = vmatprep.subr.mxu0 0.0
    %357 = vmatpush1.msra.mxu0 0.0
    %358 = vmatprep.subr.mxu0 0.0
    %359 = vmatpush1.msra.mxu0 0.0
    %360 = vmatprep.subr.mxu0 0.0
    %361 = vmatpush1.msra.mxu0 0.0
    %362 = vmatprep.mubr.f32.mxu0 0.0
    %v363 = vand.u32 %v86, 4294901760
    %v364 = vsub.f32 %v86, %v363
    %365 = vmatmul.mubr.f32.gmra.mrb[0].mxu0 %v364
    %v366 = vpop.f32.mrb[0].mxu0
    %v367 = vadd.f32 %v279, %v366
    %v368 = vpop.f32.mrb[0].mxu0
    %369 = vdwg.mxu0
    %370 = vmatprep.subr.mxu0 0.0
    %v371 = vand.u32 %v76, 4294901760
    %372 = vmatpush1.msra.mxu0 %v371
    %373 = vmatprep.subr.mxu0 0.0
    %v374 = vand.u32 %v77, 4294901760
    %375 = vmatpush1.msra.mxu0 %v374
    %376 = vmatprep.subr.mxu0 0.0
    %v377 = vand.u32 %v78, 4294901760
    %378 = vmatpush1.msra.mxu0 %v377
    %379 = vmatprep.subr.mxu0 0.0
    %v380 = vand.u32 %v79, 4294901760
    %381 = vmatpush1.msra.mxu0 %v380
    %382 = vmatprep.subr.mxu0 0.0
    %v383 = vand.u32 %v80, 4294901760
    %384 = vmatpush1.msra.mxu0 %v383
    %385 = vmatprep.subr.mxu0 0.0
    %v386 = vand.u32 %v81, 4294901760
    %387 = vmatpush1.msra.mxu0 %v386
    %388 = vmatprep.subr.mxu0 0.0
    %v389 = vand.u32 %v82, 4294901760
    %390 = vmatpush1.msra.mxu0 %v389
    %391 = vmatprep.subr.mxu0 0.0
    %v392 = vand.u32 %v83, 4294901760
    %393 = vmatpush1.msra.mxu0 %v392
    %394 = vmatprep.subr.mxu0 0.0
    %395 = vmatpush1.msra.mxu0 0.0
    %396 = vmatprep.subr.mxu0 0.0
    %397 = vmatpush1.msra.mxu0 0.0
    %398 = vmatprep.subr.mxu0 0.0
    %399 = vmatpush1.msra.mxu0 0.0
    %400 = vmatprep.subr.mxu0 0.0
    %401 = vmatpush1.msra.mxu0 0.0
    %402 = vmatprep.subr.mxu0 0.0
    %403 = vmatpush1.msra.mxu0 0.0
    %404 = vmatprep.subr.mxu0 0.0
    %405 = vmatpush1.msra.mxu0 0.0
    %406 = vmatprep.subr.mxu0 0.0
    %407 = vmatpush1.msra.mxu0 0.0
    %408 = vmatprep.subr.mxu0 0.0
    %409 = vmatpush1.msra.mxu0 0.0
    %410 = vmatprep.subr.mxu0 0.0
    %411 = vmatpush1.msra.mxu0 0.0
    %412 = vmatprep.subr.mxu0 0.0
    %413 = vmatpush1.msra.mxu0 0.0
    %414 = vmatprep.subr.mxu0 0.0
    %415 = vmatpush1.msra.mxu0 0.0
    %416 = vmatprep.subr.mxu0 0.0
    %417 = vmatpush1.msra.mxu0 0.0
    %418 = vmatprep.subr.mxu0 0.0
    %419 = vmatpush1.msra.mxu0 0.0
    %420 = vmatprep.subr.mxu0 0.0
    %421 = vmatpush1.msra.mxu0 0.0
    %422 = vmatprep.subr.mxu0 0.0
    %423 = vmatpush1.msra.mxu0 0.0
    %424 = vmatprep.subr.mxu0 0.0
    %425 = vmatpush1.msra.mxu0 0.0
    %426 = vmatprep.subr.mxu0 0.0
    %427 = vmatpush1.msra.mxu0 0.0
    %428 = vmatprep.subr.mxu0 0.0
    %429 = vmatpush1.msra.mxu0 0.0
    %430 = vmatprep.subr.mxu0 0.0
    %431 = vmatpush1.msra.mxu0 0.0
    %432 = vmatprep.subr.mxu0 0.0
    %433 = vmatpush1.msra.mxu0 0.0
    %434 = vmatprep.subr.mxu0 0.0
    %435 = vmatpush1.msra.mxu0 0.0
    %436 = vmatprep.subr.mxu0 0.0
    %437 = vmatpush1.msra.mxu0 0.0
    %438 = vmatprep.subr.mxu0 0.0
    %439 = vmatpush1.msra.mxu0 0.0
    %440 = vmatprep.subr.mxu0 0.0
    %441 = vmatpush1.msra.mxu0 0.0
    %442 = vmatprep.mubr.f32.mxu0 0.0
    %v443 = vand.u32 %v86, 4294901760
    %v444 = vsub.f32 %v86, %v443
    %v445 = vand.u32 %v444, 4294901760
    %446 = vmatmul.mubr.f32.gmra.mrb[0].mxu0 %v445
    %v447 = vpop.f32.mrb[0].mxu0
    %v448 = vadd.f32 %v367, %v447
    %v449 = vpop.f32.mrb[0].mxu0
    %450 = vdwg.mxu0
    %451 = vmatprep.subr.mxu0 0.0
    %v452 = vand.u32 %v76, 4294901760
    %v453 = vsub.f32 %v76, %v452
    %v454 = vand.u32 %v453, 4294901760
    %455 = vmatpush1.msra.mxu0 %v454
    %456 = vmatprep.subr.mxu0 0.0
    %v457 = vand.u32 %v77, 4294901760
    %v458 = vsub.f32 %v77, %v457
    %v459 = vand.u32 %v458, 4294901760
    %460 = vmatpush1.msra.mxu0 %v459
    %461 = vmatprep.subr.mxu0 0.0
    %v462 = vand.u32 %v78, 4294901760
    %v463 = vsub.f32 %v78, %v462
    %v464 = vand.u32 %v463, 4294901760
    %465 = vmatpush1.msra.mxu0 %v464
    %466 = vmatprep.subr.mxu0 0.0
    %v467 = vand.u32 %v79, 4294901760
    %v468 = vsub.f32 %v79, %v467
    %v469 = vand.u32 %v468, 4294901760
    %470 = vmatpush1.msra.mxu0 %v469
    %471 = vmatprep.subr.mxu0 0.0
    %v472 = vand.u32 %v80, 4294901760
    %v473 = vsub.f32 %v80, %v472
    %v474 = vand.u32 %v473, 4294901760
    %475 = vmatpush1.msra.mxu0 %v474
    %476 = vmatprep.subr.mxu0 0.0
    %v477 = vand.u32 %v81, 4294901760
    %v478 = vsub.f32 %v81, %v477
    %v479 = vand.u32 %v478, 4294901760
    %480 = vmatpush1.msra.mxu0 %v479
    %481 = vmatprep.subr.mxu0 0.0
    %v482 = vand.u32 %v82, 4294901760
    %v483 = vsub.f32 %v82, %v482
    %v484 = vand.u32 %v483, 4294901760
    %485 = vmatpush1.msra.mxu0 %v484
    %486 = vmatprep.subr.mxu0 0.0
    %v487 = vand.u32 %v83, 4294901760
    %v488 = vsub.f32 %v83, %v487
    %v489 = vand.u32 %v488, 4294901760
    %490 = vmatpush1.msra.mxu0 %v489
    %491 = vmatprep.subr.mxu0 0.0
    %492 = vmatpush1.msra.mxu0 0.0
    %493 = vmatprep.subr.mxu0 0.0
    %494 = vmatpush1.msra.mxu0 0.0
    %495 = vmatprep.subr.mxu0 0.0
    %496 = vmatpush1.msra.mxu0 0.0
    %497 = vmatprep.subr.mxu0 0.0
    %498 = vmatpush1.msra.mxu0 0.0
    %499 = vmatprep.subr.mxu0 0.0
    %500 = vmatpush1.msra.mxu0 0.0
    %501 = vmatprep.subr.mxu0 0.0
    %502 = vmatpush1.msra.mxu0 0.0
    %503 = vmatprep.subr.mxu0 0.0
    %504 = vmatpush1.msra.mxu0 0.0
    %505 = vmatprep.subr.mxu0 0.0
    %506 = vmatpush1.msra.mxu0 0.0
    %507 = vmatprep.subr.mxu0 0.0
    %508 = vmatpush1.msra.mxu0 0.0
    %509 = vmatprep.subr.mxu0 0.0
    %510 = vmatpush1.msra.mxu0 0.0
    %511 = vmatprep.subr.mxu0 0.0
    %512 = vmatpush1.msra.mxu0 0.0
    %513 = vmatprep.subr.mxu0 0.0
    %514 = vmatpush1.msra.mxu0 0.0
    %515 = vmatprep.subr.mxu0 0.0
    %516 = vmatpush1.msra.mxu0 0.0
    %517 = vmatprep.subr.mxu0 0.0
    %518 = vmatpush1.msra.mxu0 0.0
    %519 = vmatprep.subr.mxu0 0.0
    %520 = vmatpush1.msra.mxu0 0.0
    %521 = vmatprep.subr.mxu0 0.0
    %522 = vmatpush1.msra.mxu0 0.0
    %523 = vmatprep.subr.mxu0 0.0
    %524 = vmatpush1.msra.mxu0 0.0
    %525 = vmatprep.subr.mxu0 0.0
    %526 = vmatpush1.msra.mxu0 0.0
    %527 = vmatprep.subr.mxu0 0.0
    %528 = vmatpush1.msra.mxu0 0.0
    %529 = vmatprep.subr.mxu0 0.0
    %530 = vmatpush1.msra.mxu0 0.0
    %531 = vmatprep.subr.mxu0 0.0
    %532 = vmatpush1.msra.mxu0 0.0
    %533 = vmatprep.subr.mxu0 0.0
    %534 = vmatpush1.msra.mxu0 0.0
    %535 = vmatprep.subr.mxu0 0.0
    %536 = vmatpush1.msra.mxu0 0.0
    %537 = vmatprep.subr.mxu0 0.0
    %538 = vmatpush1.msra.mxu0 0.0
    %539 = vmatprep.mubr.f32.mxu0 0.0
    %v540 = vand.u32 %v86, 4294901760
    %541 = vmatmul.mubr.f32.gmra.mrb[0].mxu0 %v540
    %v542 = vpop.f32.mrb[0].mxu0
    %v543 = vadd.f32 %v448, %v542
    %v544 = vpop.f32.mrb[0].mxu0
    %545 = vdwg.mxu0
    %546 = vmatprep.subr.mxu0 0.0
    %v547 = vand.u32 %v76, 4294901760
    %548 = vmatpush1.msra.mxu0 %v547
    %549 = vmatprep.subr.mxu0 0.0
    %v550 = vand.u32 %v77, 4294901760
    %551 = vmatpush1.msra.mxu0 %v550
    %552 = vmatprep.subr.mxu0 0.0
    %v553 = vand.u32 %v78, 4294901760
    %554 = vmatpush1.msra.mxu0 %v553
    %555 = vmatprep.subr.mxu0 0.0
    %v556 = vand.u32 %v79, 4294901760
    %557 = vmatpush1.msra.mxu0 %v556
    %558 = vmatprep.subr.mxu0 0.0
    %v559 = vand.u32 %v80, 4294901760
    %560 = vmatpush1.msra.mxu0 %v559
    %561 = vmatprep.subr.mxu0 0.0
    %v562 = vand.u32 %v81, 4294901760
    %563 = vmatpush1.msra.mxu0 %v562
    %564 = vmatprep.subr.mxu0 0.0
    %v565 = vand.u32 %v82, 4294901760
    %566 = vmatpush1.msra.mxu0 %v565
    %567 = vmatprep.subr.mxu0 0.0
    %v568 = vand.u32 %v83, 4294901760
    %569 = vmatpush1.msra.mxu0 %v568
    %570 = vmatprep.subr.mxu0 0.0
    %571 = vmatpush1.msra.mxu0 0.0
    %572 = vmatprep.subr.mxu0 0.0
    %573 = vmatpush1.msra.mxu0 0.0
    %574 = vmatprep.subr.mxu0 0.0
    %575 = vmatpush1.msra.mxu0 0.0
    %576 = vmatprep.subr.mxu0 0.0
    %577 = vmatpush1.msra.mxu0 0.0
    %578 = vmatprep.subr.mxu0 0.0
    %579 = vmatpush1.msra.mxu0 0.0
    %580 = vmatprep.subr.mxu0 0.0
    %581 = vmatpush1.msra.mxu0 0.0
    %582 = vmatprep.subr.mxu0 0.0
    %583 = vmatpush1.msra.mxu0 0.0
    %584 = vmatprep.subr.mxu0 0.0
    %585 = vmatpush1.msra.mxu0 0.0
    %586 = vmatprep.subr.mxu0 0.0
    %587 = vmatpush1.msra.mxu0 0.0
    %588 = vmatprep.subr.mxu0 0.0
    %589 = vmatpush1.msra.mxu0 0.0
    %590 = vmatprep.subr.mxu0 0.0
    %591 = vmatpush1.msra.mxu0 0.0
    %592 = vmatprep.subr.mxu0 0.0
    %593 = vmatpush1.msra.mxu0 0.0
    %594 = vmatprep.subr.mxu0 0.0
    %595 = vmatpush1.msra.mxu0 0.0
    %596 = vmatprep.subr.mxu0 0.0
    %597 = vmatpush1.msra.mxu0 0.0
    %598 = vmatprep.subr.mxu0 0.0
    %599 = vmatpush1.msra.mxu0 0.0
    %600 = vmatprep.subr.mxu0 0.0
    %601 = vmatpush1.msra.mxu0 0.0
    %602 = vmatprep.subr.mxu0 0.0
    %603 = vmatpush1.msra.mxu0 0.0
    %604 = vmatprep.subr.mxu0 0.0
    %605 = vmatpush1.msra.mxu0 0.0
    %606 = vmatprep.subr.mxu0 0.0
    %607 = vmatpush1.msra.mxu0 0.0
    %608 = vmatprep.subr.mxu0 0.0
    %609 = vmatpush1.msra.mxu0 0.0
    %610 = vmatprep.subr.mxu0 0.0
    %611 = vmatpush1.msra.mxu0 0.0
    %612 = vmatprep.subr.mxu0 0.0
    %613 = vmatpush1.msra.mxu0 0.0
    %614 = vmatprep.subr.mxu0 0.0
    %615 = vmatpush1.msra.mxu0 0.0
    %616 = vmatprep.subr.mxu0 0.0
    %617 = vmatpush1.msra.mxu0 0.0
    %618 = vmatprep.mubr.f32.mxu0 0.0
    %v619 = vand.u32 %v86, 4294901760
    %620 = vmatmul.mubr.f32.gmra.mrb[0].mxu0 %v619
    %v621 = vpop.f32.mrb[0].mxu0
    %v622 = vadd.f32 %v543, %v621
    %v623 = vpop.f32.mrb[0].mxu0
    %624 = vdwg.mxu0
    %v625 = vld [vmem:[#allocation2] sm:$0xf]
    %v626 = vadd.f32 %v625, %v622
    %v627 = vld [vmem:[#allocation8] sm:$0xff]
    %v628 = vld [vmem:[#allocation8 + $0x8] sm:$0xff]
    %v629 = vld [vmem:[#allocation8 + $0x10] sm:$0xff]
    %v630 = vld [vmem:[#allocation8 + $0x18] sm:$0xff]
    %v631 = vld [vmem:[#allocation8 + $0x20] sm:$0xff]
    %v632 = vld [vmem:[#allocation8 + $0x28] sm:$0xff]
    %v633 = vld [vmem:[#allocation8 + $0x30] sm:$0xff]
    %v634 = vld [vmem:[#allocation8 + $0x38] sm:$0xff]
    %v635 = vld [vmem:[#allocation8 + $0x40] sm:$0xff]
    %v636 = vld [vmem:[#allocation8 + $0x48] sm:$0xff]
    %v637 = vld [vmem:[#allocation8 + $0x50] sm:$0xff]
    %v638 = vld [vmem:[#allocation8 + $0x58] sm:$0xff]
    %v639 = vld [vmem:[#allocation8 + $0x60] sm:$0xff]
    %v640 = vld [vmem:[#allocation8 + $0x68] sm:$0xff]
    %v641 = vld [vmem:[#allocation8 + $0x70] sm:$0xff]
    %v642 = vld [vmem:[#allocation8 + $0x78] sm:$0xff]
    %643 = vmatprep.subr.mxu0 0.0
    %v644 = vand.u32 %v627, 4294901760
    %645 = vmatpush1.msra.mxu0 %v644
    %646 = vmatprep.subr.mxu0 0.0
    %v647 = vand.u32 %v628, 4294901760
    %648 = vmatpush1.msra.mxu0 %v647
    %649 = vmatprep.subr.mxu0 0.0
    %v650 = vand.u32 %v629, 4294901760
    %651 = vmatpush1.msra.mxu0 %v650
    %652 = vmatprep.subr.mxu0 0.0
    %v653 = vand.u32 %v630, 4294901760
    %654 = vmatpush1.msra.mxu0 %v653
    %655 = vmatprep.subr.mxu0 0.0
    %v656 = vand.u32 %v631, 4294901760
    %657 = vmatpush1.msra.mxu0 %v656
    %658 = vmatprep.subr.mxu0 0.0
    %v659 = vand.u32 %v632, 4294901760
    %660 = vmatpush1.msra.mxu0 %v659
    %661 = vmatprep.subr.mxu0 0.0
    %v662 = vand.u32 %v633, 4294901760
    %663 = vmatpush1.msra.mxu0 %v662
    %664 = vmatprep.subr.mxu0 0.0
    %v665 = vand.u32 %v634, 4294901760
    %666 = vmatpush1.msra.mxu0 %v665
    %667 = vmatprep.subr.mxu0 0.0
    %v668 = vand.u32 %v635, 4294901760
    %669 = vmatpush1.msra.mxu0 %v668
    %670 = vmatprep.subr.mxu0 0.0
    %v671 = vand.u32 %v636, 4294901760
    %672 = vmatpush1.msra.mxu0 %v671
    %673 = vmatprep.subr.mxu0 0.0
    %v674 = vand.u32 %v637, 4294901760
    %675 = vmatpush1.msra.mxu0 %v674
    %676 = vmatprep.subr.mxu0 0.0
    %v677 = vand.u32 %v638, 4294901760
    %678 = vmatpush1.msra.mxu0 %v677
    %679 = vmatprep.subr.mxu0 0.0
    %v680 = vand.u32 %v639, 4294901760
    %681 = vmatpush1.msra.mxu0 %v680
    %682 = vmatprep.subr.mxu0 0.0
    %v683 = vand.u32 %v640, 4294901760
    %684 = vmatpush1.msra.mxu0 %v683
    %685 = vmatprep.subr.mxu0 0.0
    %v686 = vand.u32 %v641, 4294901760
    %687 = vmatpush1.msra.mxu0 %v686
    %688 = vmatprep.subr.mxu0 0.0
    %v689 = vand.u32 %v642, 4294901760
    %690 = vmatpush1.msra.mxu0 %v689
    %691 = vmatprep.subr.mxu0 0.0
    %692 = vmatpush1.msra.mxu0 0.0
    %693 = vmatprep.subr.mxu0 0.0
    %694 = vmatpush1.msra.mxu0 0.0
    %695 = vmatprep.subr.mxu0 0.0
    %696 = vmatpush1.msra.mxu0 0.0
    %697 = vmatprep.subr.mxu0 0.0
    %698 = vmatpush1.msra.mxu0 0.0
    %699 = vmatprep.subr.mxu0 0.0
    %700 = vmatpush1.msra.mxu0 0.0
    %701 = vmatprep.subr.mxu0 0.0
    %702 = vmatpush1.msra.mxu0 0.0
    %703 = vmatprep.subr.mxu0 0.0
    %704 = vmatpush1.msra.mxu0 0.0
    %705 = vmatprep.subr.mxu0 0.0
    %706 = vmatpush1.msra.mxu0 0.0
    %707 = vmatprep.subr.mxu0 0.0
    %708 = vmatpush1.msra.mxu0 0.0
    %709 = vmatprep.subr.mxu0 0.0
    %710 = vmatpush1.msra.mxu0 0.0
    %711 = vmatprep.subr.mxu0 0.0
    %712 = vmatpush1.msra.mxu0 0.0
    %713 = vmatprep.subr.mxu0 0.0
    %714 = vmatpush1.msra.mxu0 0.0
    %715 = vmatprep.subr.mxu0 0.0
    %716 = vmatpush1.msra.mxu0 0.0
    %717 = vmatprep.subr.mxu0 0.0
    %718 = vmatpush1.msra.mxu0 0.0
    %719 = vmatprep.subr.mxu0 0.0
    %720 = vmatpush1.msra.mxu0 0.0
    %721 = vmatprep.subr.mxu0 0.0
    %722 = vmatpush1.msra.mxu0 0.0
    %723 = vmatprep.mubr.f32.mxu0 0.0
    %v724 = vand.u32 %v626, 4294901760
    %v725 = vsub.f32 %v626, %v724
    %v726 = vand.u32 %v725, 4294901760
    %v727 = vsub.f32 %v725, %v726
    %v728 = vand.u32 %v727, 4294901760
    %729 = vmatmul.mubr.f32.gmra.mrb[0].mxu0 %v728
    %v730 = vpop.f32.mrb[0].mxu0
    %v731 = vadd.f32 0.0, %v730
    %v732 = vpop.f32.mrb[0].mxu0
    %733 = vdwg.mxu0
    %734 = vmatprep.subr.mxu0 0.0
    %v735 = vand.u32 %v627, 4294901760
    %v736 = vsub.f32 %v627, %v735
    %v737 = vand.u32 %v736, 4294901760
    %v738 = vsub.f32 %v736, %v737
    %v739 = vand.u32 %v738, 4294901760
    %740 = vmatpush1.msra.mxu0 %v739
    %741 = vmatprep.subr.mxu0 0.0
    %v742 = vand.u32 %v628, 4294901760
    %v743 = vsub.f32 %v628, %v742
    %v744 = vand.u32 %v743, 4294901760
    %v745 = vsub.f32 %v743, %v744
    %v746 = vand.u32 %v745, 4294901760
    %747 = vmatpush1.msra.mxu0 %v746
    %748 = vmatprep.subr.mxu0 0.0
    %v749 = vand.u32 %v629, 4294901760
    %v750 = vsub.f32 %v629, %v749
    %v751 = vand.u32 %v750, 4294901760
    %v752 = vsub.f32 %v750, %v751
    %v753 = vand.u32 %v752, 4294901760
    %754 = vmatpush1.msra.mxu0 %v753
    %755 = vmatprep.subr.mxu0 0.0
    %v756 = vand.u32 %v630, 4294901760
    %v757 = vsub.f32 %v630, %v756
    %v758 = vand.u32 %v757, 4294901760
    %v759 = vsub.f32 %v757, %v758
    %v760 = vand.u32 %v759, 4294901760
    %761 = vmatpush1.msra.mxu0 %v760
    %762 = vmatprep.subr.mxu0 0.0
    %v763 = vand.u32 %v631, 4294901760
    %v764 = vsub.f32 %v631, %v763
    %v765 = vand.u32 %v764, 4294901760
    %v766 = vsub.f32 %v764, %v765
    %v767 = vand.u32 %v766, 4294901760
    %768 = vmatpush1.msra.mxu0 %v767
    %769 = vmatprep.subr.mxu0 0.0
    %v770 = vand.u32 %v632, 4294901760
    %v771 = vsub.f32 %v632, %v770
    %v772 = vand.u32 %v771, 4294901760
    %v773 = vsub.f32 %v771, %v772
    %v774 = vand.u32 %v773, 4294901760
    %775 = vmatpush1.msra.mxu0 %v774
    %776 = vmatprep.subr.mxu0 0.0
    %v777 = vand.u32 %v633, 4294901760
    %v778 = vsub.f32 %v633, %v777
    %v779 = vand.u32 %v778, 4294901760
    %v780 = vsub.f32 %v778, %v779
    %v781 = vand.u32 %v780, 4294901760
    %782 = vmatpush1.msra.mxu0 %v781
    %783 = vmatprep.subr.mxu0 0.0
    %v784 = vand.u32 %v634, 4294901760
    %v785 = vsub.f32 %v634, %v784
    %v786 = vand.u32 %v785, 4294901760
    %v787 = vsub.f32 %v785, %v786
    %v788 = vand.u32 %v787, 4294901760
    %789 = vmatpush1.msra.mxu0 %v788
    %790 = vmatprep.subr.mxu0 0.0
    %v791 = vand.u32 %v635, 4294901760
    %v792 = vsub.f32 %v635, %v791
    %v793 = vand.u32 %v792, 4294901760
    %v794 = vsub.f32 %v792, %v793
    %v795 = vand.u32 %v794, 4294901760
    %796 = vmatpush1.msra.mxu0 %v795
    %797 = vmatprep.subr.mxu0 0.0
    %v798 = vand.u32 %v636, 4294901760
    %v799 = vsub.f32 %v636, %v798
    %v800 = vand.u32 %v799, 4294901760
    %v801 = vsub.f32 %v799, %v800
    %v802 = vand.u32 %v801, 4294901760
    %803 = vmatpush1.msra.mxu0 %v802
    %804 = vmatprep.subr.mxu0 0.0
    %v805 = vand.u32 %v637, 4294901760
    %v806 = vsub.f32 %v637, %v805
    %v807 = vand.u32 %v806, 4294901760
    %v808 = vsub.f32 %v806, %v807
    %v809 = vand.u32 %v808, 4294901760
    %810 = vmatpush1.msra.mxu0 %v809
    %811 = vmatprep.subr.mxu0 0.0
    %v812 = vand.u32 %v638, 4294901760
    %v813 = vsub.f32 %v638, %v812
    %v814 = vand.u32 %v813, 4294901760
    %v815 = vsub.f32 %v813, %v814
    %v816 = vand.u32 %v815, 4294901760
    %817 = vmatpush1.msra.mxu0 %v816
    %818 = vmatprep.subr.mxu0 0.0
    %v819 = vand.u32 %v639, 4294901760
    %v820 = vsub.f32 %v639, %v819
    %v821 = vand.u32 %v820, 4294901760
    %v822 = vsub.f32 %v820, %v821
    %v823 = vand.u32 %v822, 4294901760
    %824 = vmatpush1.msra.mxu0 %v823
    %825 = vmatprep.subr.mxu0 0.0
    %v826 = vand.u32 %v640, 4294901760
    %v827 = vsub.f32 %v640, %v826
    %v828 = vand.u32 %v827, 4294901760
    %v829 = vsub.f32 %v827, %v828
    %v830 = vand.u32 %v829, 4294901760
    %831 = vmatpush1.msra.mxu0 %v830
    %832 = vmatprep.subr.mxu0 0.0
    %v833 = vand.u32 %v641, 4294901760
    %v834 = vsub.f32 %v641, %v833
    %v835 = vand.u32 %v834, 4294901760
    %v836 = vsub.f32 %v834, %v835
    %v837 = vand.u32 %v836, 4294901760
    %838 = vmatpush1.msra.mxu0 %v837
    %839 = vmatprep.subr.mxu0 0.0
    %v840 = vand.u32 %v642, 4294901760
    %v841 = vsub.f32 %v642, %v840
    %v842 = vand.u32 %v841, 4294901760
    %v843 = vsub.f32 %v841, %v842
    %v844 = vand.u32 %v843, 4294901760
    %845 = vmatpush1.msra.mxu0 %v844
    %846 = vmatprep.subr.mxu0 0.0
    %847 = vmatpush1.msra.mxu0 0.0
    %848 = vmatprep.subr.mxu0 0.0
    %849 = vmatpush1.msra.mxu0 0.0
    %850 = vmatprep.subr.mxu0 0.0
    %851 = vmatpush1.msra.mxu0 0.0
    %852 = vmatprep.subr.mxu0 0.0
    %853 = vmatpush1.msra.mxu0 0.0
    %854 = vmatprep.subr.mxu0 0.0
    %855 = vmatpush1.msra.mxu0 0.0
    %856 = vmatprep.subr.mxu0 0.0
    %857 = vmatpush1.msra.mxu0 0.0
    %858 = vmatprep.subr.mxu0 0.0
    %859 = vmatpush1.msra.mxu0 0.0
    %860 = vmatprep.subr.mxu0 0.0
    %861 = vmatpush1.msra.mxu0 0.0
    %862 = vmatprep.subr.mxu0 0.0
    %863 = vmatpush1.msra.mxu0 0.0
    %864 = vmatprep.subr.mxu0 0.0
    %865 = vmatpush1.msra.mxu0 0.0
    %866 = vmatprep.subr.mxu0 0.0
    %867 = vmatpush1.msra.mxu0 0.0
    %868 = vmatprep.subr.mxu0 0.0
    %869 = vmatpush1.msra.mxu0 0.0
    %870 = vmatprep.subr.mxu0 0.0
    %871 = vmatpush1.msra.mxu0 0.0
    %872 = vmatprep.subr.mxu0 0.0
    %873 = vmatpush1.msra.mxu0 0.0
    %874 = vmatprep.subr.mxu0 0.0
    %875 = vmatpush1.msra.mxu0 0.0
    %876 = vmatprep.subr.mxu0 0.0
    %877 = vmatpush1.msra.mxu0 0.0
    %878 = vmatprep.mubr.f32.mxu0 0.0
    %v879 = vand.u32 %v626, 4294901760
    %880 = vmatmul.mubr.f32.gmra.mrb[0].mxu0 %v879
    %v881 = vpop.f32.mrb[0].mxu0
    %v882 = vadd.f32 %v731, %v881
    %v883 = vpop.f32.mrb[0].mxu0
    %884 = vdwg.mxu0
    %885 = vmatprep.subr.mxu0 0.0
    %v886 = vand.u32 %v627, 4294901760
    %v887 = vsub.f32 %v627, %v886
    %888 = vmatpush1.msra.mxu0 %v887
    %889 = vmatprep.subr.mxu0 0.0
    %v890 = vand.u32 %v628, 4294901760
    %v891 = vsub.f32 %v628, %v890
    %892 = vmatpush1.msra.mxu0 %v891
    %893 = vmatprep.subr.mxu0 0.0
    %v894 = vand.u32 %v629, 4294901760
    %v895 = vsub.f32 %v629, %v894
    %896 = vmatpush1.msra.mxu0 %v895
    %897 = vmatprep.subr.mxu0 0.0
    %v898 = vand.u32 %v630, 4294901760
    %v899 = vsub.f32 %v630, %v898
    %900 = vmatpush1.msra.mxu0 %v899
    %901 = vmatprep.subr.mxu0 0.0
    %v902 = vand.u32 %v631, 4294901760
    %v903 = vsub.f32 %v631, %v902
    %904 = vmatpush1.msra.mxu0 %v903
    %905 = vmatprep.subr.mxu0 0.0
    %v906 = vand.u32 %v632, 4294901760
    %v907 = vsub.f32 %v632, %v906
    %908 = vmatpush1.msra.mxu0 %v907
    %909 = vmatprep.subr.mxu0 0.0
    %v910 = vand.u32 %v633, 4294901760
    %v911 = vsub.f32 %v633, %v910
    %912 = vmatpush1.msra.mxu0 %v911
    %913 = vmatprep.subr.mxu0 0.0
    %v914 = vand.u32 %v634, 4294901760
    %v915 = vsub.f32 %v634, %v914
    %916 = vmatpush1.msra.mxu0 %v915
    %917 = vmatprep.subr.mxu0 0.0
    %v918 = vand.u32 %v635, 4294901760
    %v919 = vsub.f32 %v635, %v918
    %920 = vmatpush1.msra.mxu0 %v919
    %921 = vmatprep.subr.mxu0 0.0
    %v922 = vand.u32 %v636, 4294901760
    %v923 = vsub.f32 %v636, %v922
    %924 = vmatpush1.msra.mxu0 %v923
    %925 = vmatprep.subr.mxu0 0.0
    %v926 = vand.u32 %v637, 4294901760
    %v927 = vsub.f32 %v637, %v926
    %928 = vmatpush1.msra.mxu0 %v927
    %929 = vmatprep.subr.mxu0 0.0
    %v930 = vand.u32 %v638, 4294901760
    %v931 = vsub.f32 %v638, %v930
    %932 = vmatpush1.msra.mxu0 %v931
    %933 = vmatprep.subr.mxu0 0.0
    %v934 = vand.u32 %v639, 4294901760
    %v935 = vsub.f32 %v639, %v934
    %936 = vmatpush1.msra.mxu0 %v935
    %937 = vmatprep.subr.mxu0 0.0
    %v938 = vand.u32 %v640, 4294901760
    %v939 = vsub.f32 %v640, %v938
    %940 = vmatpush1.msra.mxu0 %v939
    %941 = vmatprep.subr.mxu0 0.0
    %v942 = vand.u32 %v641, 4294901760
    %v943 = vsub.f32 %v641, %v942
    %944 = vmatpush1.msra.mxu0 %v943
    %945 = vmatprep.subr.mxu0 0.0
    %v946 = vand.u32 %v642, 4294901760
    %v947 = vsub.f32 %v642, %v946
    %948 = vmatpush1.msra.mxu0 %v947
    %949 = vmatprep.subr.mxu0 0.0
    %950 = vmatpush1.msra.mxu0 0.0
    %951 = vmatprep.subr.mxu0 0.0
    %952 = vmatpush1.msra.mxu0 0.0
    %953 = vmatprep.subr.mxu0 0.0
    %954 = vmatpush1.msra.mxu0 0.0
    %955 = vmatprep.subr.mxu0 0.0
    %956 = vmatpush1.msra.mxu0 0.0
    %957 = vmatprep.subr.mxu0 0.0
    %958 = vmatpush1.msra.mxu0 0.0
    %959 = vmatprep.subr.mxu0 0.0
    %960 = vmatpush1.msra.mxu0 0.0
    %961 = vmatprep.subr.mxu0 0.0
    %962 = vmatpush1.msra.mxu0 0.0
    %963 = vmatprep.subr.mxu0 0.0
    %964 = vmatpush1.msra.mxu0 0.0
    %965 = vmatprep.subr.mxu0 0.0
    %966 = vmatpush1.msra.mxu0 0.0
    %967 = vmatprep.subr.mxu0 0.0
    %968 = vmatpush1.msra.mxu0 0.0
    %969 = vmatprep.subr.mxu0 0.0
    %970 = vmatpush1.msra.mxu0 0.0
    %971 = vmatprep.subr.mxu0 0.0
    %972 = vmatpush1.msra.mxu0 0.0
    %973 = vmatprep.subr.mxu0 0.0
    %974 = vmatpush1.msra.mxu0 0.0
    %975 = vmatprep.subr.mxu0 0.0
    %976 = vmatpush1.msra.mxu0 0.0
    %977 = vmatprep.subr.mxu0 0.0
    %978 = vmatpush1.msra.mxu0 0.0
    %979 = vmatprep.subr.mxu0 0.0
    %980 = vmatpush1.msra.mxu0 0.0
    %981 = vmatprep.mubr.f32.mxu0 0.0
    %v982 = vand.u32 %v626, 4294901760
    %v983 = vsub.f32 %v626, %v982
    %984 = vmatmul.mubr.f32.gmra.mrb[0].mxu0 %v983
    %v985 = vpop.f32.mrb[0].mxu0
    %v986 = vadd.f32 %v882, %v985
    %v987 = vpop.f32.mrb[0].mxu0
    %988 = vdwg.mxu0
    %989 = vmatprep.subr.mxu0 0.0
    %v990 = vand.u32 %v627, 4294901760
    %991 = vmatpush1.msra.mxu0 %v990
    %992 = vmatprep.subr.mxu0 0.0
    %v993 = vand.u32 %v628, 4294901760
    %994 = vmatpush1.msra.mxu0 %v993
    %995 = vmatprep.subr.mxu0 0.0
    %v996 = vand.u32 %v629, 4294901760
    %997 = vmatpush1.msra.mxu0 %v996
    %998 = vmatprep.subr.mxu0 0.0
    %v999 = vand.u32 %v630, 4294901760
    %1000 = vmatpush1.msra.mxu0 %v999
    %1001 = vmatprep.subr.mxu0 0.0
    %v1002 = vand.u32 %v631, 4294901760
    %1003 = vmatpush1.msra.mxu0 %v1002
    %1004 = vmatprep.subr.mxu0 0.0
    %v1005 = vand.u32 %v632, 4294901760
    %1006 = vmatpush1.msra.mxu0 %v1005
    %1007 = vmatprep.subr.mxu0 0.0
    %v1008 = vand.u32 %v633, 4294901760
    %1009 = vmatpush1.msra.mxu0 %v1008
    %1010 = vmatprep.subr.mxu0 0.0
    %v1011 = vand.u32 %v634, 4294901760
    %1012 = vmatpush1.msra.mxu0 %v1011
    %1013 = vmatprep.subr.mxu0 0.0
    %v1014 = vand.u32 %v635, 4294901760
    %1015 = vmatpush1.msra.mxu0 %v1014
    %1016 = vmatprep.subr.mxu0 0.0
    %v1017 = vand.u32 %v636, 4294901760
    %1018 = vmatpush1.msra.mxu0 %v1017
    %1019 = vmatprep.subr.mxu0 0.0
    %v1020 = vand.u32 %v637, 4294901760
    %1021 = vmatpush1.msra.mxu0 %v1020
    %1022 = vmatprep.subr.mxu0 0.0
    %v1023 = vand.u32 %v638, 4294901760
    %1024 = vmatpush1.msra.mxu0 %v1023
    %1025 = vmatprep.subr.mxu0 0.0
    %v1026 = vand.u32 %v639, 4294901760
    %1027 = vmatpush1.msra.mxu0 %v1026
    %1028 = vmatprep.subr.mxu0 0.0
    %v1029 = vand.u32 %v640, 4294901760
    %1030 = vmatpush1.msra.mxu0 %v1029
    %1031 = vmatprep.subr.mxu0 0.0
    %v1032 = vand.u32 %v641, 4294901760
    %1033 = vmatpush1.msra.mxu0 %v1032
    %1034 = vmatprep.subr.mxu0 0.0
    %v1035 = vand.u32 %v642, 4294901760
    %1036 = vmatpush1.msra.mxu0 %v1035
    %1037 = vmatprep.subr.mxu0 0.0
    %1038 = vmatpush1.msra.mxu0 0.0
    %1039 = vmatprep.subr.mxu0 0.0
    %1040 = vmatpush1.msra.mxu0 0.0
    %1041 = vmatprep.subr.mxu0 0.0
    %1042 = vmatpush1.msra.mxu0 0.0
    %1043 = vmatprep.subr.mxu0 0.0
    %1044 = vmatpush1.msra.mxu0 0.0
    %1045 = vmatprep.subr.mxu0 0.0
    %1046 = vmatpush1.msra.mxu0 0.0
    %1047 = vmatprep.subr.mxu0 0.0
    %1048 = vmatpush1.msra.mxu0 0.0
    %1049 = vmatprep.subr.mxu0 0.0
    %1050 = vmatpush1.msra.mxu0 0.0
    %1051 = vmatprep.subr.mxu0 0.0
    %1052 = vmatpush1.msra.mxu0 0.0
    %1053 = vmatprep.subr.mxu0 0.0
    %1054 = vmatpush1.msra.mxu0 0.0
    %1055 = vmatprep.subr.mxu0 0.0
    %1056 = vmatpush1.msra.mxu0 0.0
    %1057 = vmatprep.subr.mxu0 0.0
    %1058 = vmatpush1.msra.mxu0 0.0
    %1059 = vmatprep.subr.mxu0 0.0
    %1060 = vmatpush1.msra.mxu0 0.0
    %1061 = vmatprep.subr.mxu0 0.0
    %1062 = vmatpush1.msra.mxu0 0.0
    %1063 = vmatprep.subr.mxu0 0.0
    %1064 = vmatpush1.msra.mxu0 0.0
    %1065 = vmatprep.subr.mxu0 0.0
    %1066 = vmatpush1.msra.mxu0 0.0
    %1067 = vmatprep.subr.mxu0 0.0
    %1068 = vmatpush1.msra.mxu0 0.0
    %1069 = vmatprep.mubr.f32.mxu0 0.0
    %v1070 = vand.u32 %v626, 4294901760
    %v1071 = vsub.f32 %v626, %v1070
    %v1072 = vand.u32 %v1071, 4294901760
    %1073 = vmatmul.mubr.f32.gmra.mrb[0].mxu0 %v1072
    %v1074 = vpop.f32.mrb[0].mxu0
    %v1075 = vadd.f32 %v986, %v1074
    %v1076 = vpop.f32.mrb[0].mxu0
    %1077 = vdwg.mxu0
    %1078 = vmatprep.subr.mxu0 0.0
    %v1079 = vand.u32 %v627, 4294901760
    %v1080 = vsub.f32 %v627, %v1079
    %v1081 = vand.u32 %v1080, 4294901760
    %1082 = vmatpush1.msra.mxu0 %v1081
    %1083 = vmatprep.subr.mxu0 0.0
    %v1084 = vand.u32 %v628, 4294901760
    %v1085 = vsub.f32 %v628, %v1084
    %v1086 = vand.u32 %v1085, 4294901760
    %1087 = vmatpush1.msra.mxu0 %v1086
    %1088 = vmatprep.subr.mxu0 0.0
    %v1089 = vand.u32 %v629, 4294901760
    %v1090 = vsub.f32 %v629, %v1089
    %v1091 = vand.u32 %v1090, 4294901760
    %1092 = vmatpush1.msra.mxu0 %v1091
    %1093 = vmatprep.subr.mxu0 0.0
    %v1094 = vand.u32 %v630, 4294901760
    %v1095 = vsub.f32 %v630, %v1094
    %v1096 = vand.u32 %v1095, 4294901760
    %1097 = vmatpush1.msra.mxu0 %v1096
    %1098 = vmatprep.subr.mxu0 0.0
    %v1099 = vand.u32 %v631, 4294901760
    %v1100 = vsub.f32 %v631, %v1099
    %v1101 = vand.u32 %v1100, 4294901760
    %1102 = vmatpush1.msra.mxu0 %v1101
    %1103 = vmatprep.subr.mxu0 0.0
    %v1104 = vand.u32 %v632, 4294901760
    %v1105 = vsub.f32 %v632, %v1104
    %v1106 = vand.u32 %v1105, 4294901760
    %1107 = vmatpush1.msra.mxu0 %v1106
    %1108 = vmatprep.subr.mxu0 0.0
    %v1109 = vand.u32 %v633, 4294901760
    %v1110 = vsub.f32 %v633, %v1109
    %v1111 = vand.u32 %v1110, 4294901760
    %1112 = vmatpush1.msra.mxu0 %v1111
    %1113 = vmatprep.subr.mxu0 0.0
    %v1114 = vand.u32 %v634, 4294901760
    %v1115 = vsub.f32 %v634, %v1114
    %v1116 = vand.u32 %v1115, 4294901760
    %1117 = vmatpush1.msra.mxu0 %v1116
    %1118 = vmatprep.subr.mxu0 0.0
    %v1119 = vand.u32 %v635, 4294901760
    %v1120 = vsub.f32 %v635, %v1119
    %v1121 = vand.u32 %v1120, 4294901760
    %1122 = vmatpush1.msra.mxu0 %v1121
    %1123 = vmatprep.subr.mxu0 0.0
    %v1124 = vand.u32 %v636, 4294901760
    %v1125 = vsub.f32 %v636, %v1124
    %v1126 = vand.u32 %v1125, 4294901760
    %1127 = vmatpush1.msra.mxu0 %v1126
    %1128 = vmatprep.subr.mxu0 0.0
    %v1129 = vand.u32 %v637, 4294901760
    %v1130 = vsub.f32 %v637, %v1129
    %v1131 = vand.u32 %v1130, 4294901760
    %1132 = vmatpush1.msra.mxu0 %v1131
    %1133 = vmatprep.subr.mxu0 0.0
    %v1134 = vand.u32 %v638, 4294901760
    %v1135 = vsub.f32 %v638, %v1134
    %v1136 = vand.u32 %v1135, 4294901760
    %1137 = vmatpush1.msra.mxu0 %v1136
    %1138 = vmatprep.subr.mxu0 0.0
    %v1139 = vand.u32 %v639, 4294901760
    %v1140 = vsub.f32 %v639, %v1139
    %v1141 = vand.u32 %v1140, 4294901760
    %1142 = vmatpush1.msra.mxu0 %v1141
    %1143 = vmatprep.subr.mxu0 0.0
    %v1144 = vand.u32 %v640, 4294901760
    %v1145 = vsub.f32 %v640, %v1144
    %v1146 = vand.u32 %v1145, 4294901760
    %1147 = vmatpush1.msra.mxu0 %v1146
    %1148 = vmatprep.subr.mxu0 0.0
    %v1149 = vand.u32 %v641, 4294901760
    %v1150 = vsub.f32 %v641, %v1149
    %v1151 = vand.u32 %v1150, 4294901760
    %1152 = vmatpush1.msra.mxu0 %v1151
    %1153 = vmatprep.subr.mxu0 0.0
    %v1154 = vand.u32 %v642, 4294901760
    %v1155 = vsub.f32 %v642, %v1154
    %v1156 = vand.u32 %v1155, 4294901760
    %1157 = vmatpush1.msra.mxu0 %v1156
    %1158 = vmatprep.subr.mxu0 0.0
    %1159 = vmatpush1.msra.mxu0 0.0
    %1160 = vmatprep.subr.mxu0 0.0
    %1161 = vmatpush1.msra.mxu0 0.0
    %1162 = vmatprep.subr.mxu0 0.0
    %1163 = vmatpush1.msra.mxu0 0.0
    %1164 = vmatprep.subr.mxu0 0.0
    %1165 = vmatpush1.msra.mxu0 0.0
    %1166 = vmatprep.subr.mxu0 0.0
    %1167 = vmatpush1.msra.mxu0 0.0
    %1168 = vmatprep.subr.mxu0 0.0
    %1169 = vmatpush1.msra.mxu0 0.0
    %1170 = vmatprep.subr.mxu0 0.0
    %1171 = vmatpush1.msra.mxu0 0.0
    %1172 = vmatprep.subr.mxu0 0.0
    %1173 = vmatpush1.msra.mxu0 0.0
    %1174 = vmatprep.subr.mxu0 0.0
    %1175 = vmatpush1.msra.mxu0 0.0
    %1176 = vmatprep.subr.mxu0 0.0
    %1177 = vmatpush1.msra.mxu0 0.0
    %1178 = vmatprep.subr.mxu0 0.0
    %1179 = vmatpush1.msra.mxu0 0.0
    %1180 = vmatprep.subr.mxu0 0.0
    %1181 = vmatpush1.msra.mxu0 0.0
    %1182 = vmatprep.subr.mxu0 0.0
    %1183 = vmatpush1.msra.mxu0 0.0
    %1184 = vmatprep.subr.mxu0 0.0
    %1185 = vmatpush1.msra.mxu0 0.0
    %1186 = vmatprep.subr.mxu0 0.0
    %1187 = vmatpush1.msra.mxu0 0.0
    %1188 = vmatprep.subr.mxu0 0.0
    %1189 = vmatpush1.msra.mxu0 0.0
    %1190 = vmatprep.mubr.f32.mxu0 0.0
    %v1191 = vand.u32 %v626, 4294901760
    %1192 = vmatmul.mubr.f32.gmra.mrb[0].mxu0 %v1191
    %v1193 = vpop.f32.mrb[0].mxu0
    %v1194 = vadd.f32 %v1075, %v1193
    %v1195 = vpop.f32.mrb[0].mxu0
    %1196 = vdwg.mxu0
    %1197 = vmatprep.subr.mxu0 0.0
    %v1198 = vand.u32 %v627, 4294901760
    %1199 = vmatpush1.msra.mxu0 %v1198
    %1200 = vmatprep.subr.mxu0 0.0
    %v1201 = vand.u32 %v628, 4294901760
    %1202 = vmatpush1.msra.mxu0 %v1201
    %1203 = vmatprep.subr.mxu0 0.0
    %v1204 = vand.u32 %v629, 4294901760
    %1205 = vmatpush1.msra.mxu0 %v1204
    %1206 = vmatprep.subr.mxu0 0.0
    %v1207 = vand.u32 %v630, 4294901760
    %1208 = vmatpush1.msra.mxu0 %v1207
    %1209 = vmatprep.subr.mxu0 0.0
    %v1210 = vand.u32 %v631, 4294901760
    %1211 = vmatpush1.msra.mxu0 %v1210
    %1212 = vmatprep.subr.mxu0 0.0
    %v1213 = vand.u32 %v632, 4294901760
    %1214 = vmatpush1.msra.mxu0 %v1213
    %1215 = vmatprep.subr.mxu0 0.0
    %v1216 = vand.u32 %v633, 4294901760
    %1217 = vmatpush1.msra.mxu0 %v1216
    %1218 = vmatprep.subr.mxu0 0.0
    %v1219 = vand.u32 %v634, 4294901760
    %1220 = vmatpush1.msra.mxu0 %v1219
    %1221 = vmatprep.subr.mxu0 0.0
    %v1222 = vand.u32 %v635, 4294901760
    %1223 = vmatpush1.msra.mxu0 %v1222
    %1224 = vmatprep.subr.mxu0 0.0
    %v1225 = vand.u32 %v636, 4294901760
    %1226 = vmatpush1.msra.mxu0 %v1225
    %1227 = vmatprep.subr.mxu0 0.0
    %v1228 = vand.u32 %v637, 4294901760
    %1229 = vmatpush1.msra.mxu0 %v1228
    %1230 = vmatprep.subr.mxu0 0.0
    %v1231 = vand.u32 %v638, 4294901760
    %1232 = vmatpush1.msra.mxu0 %v1231
    %1233 = vmatprep.subr.mxu0 0.0
    %v1234 = vand.u32 %v639, 4294901760
    %1235 = vmatpush1.msra.mxu0 %v1234
    %1236 = vmatprep.subr.mxu0 0.0
    %v1237 = vand.u32 %v640, 4294901760
    %1238 = vmatpush1.msra.mxu0 %v1237
    %1239 = vmatprep.subr.mxu0 0.0
    %v1240 = vand.u32 %v641, 4294901760
    %1241 = vmatpush1.msra.mxu0 %v1240
    %1242 = vmatprep.subr.mxu0 0.0
    %v1243 = vand.u32 %v642, 4294901760
    %1244 = vmatpush1.msra.mxu0 %v1243
    %1245 = vmatprep.subr.mxu0 0.0
    %1246 = vmatpush1.msra.mxu0 0.0
    %1247 = vmatprep.subr.mxu0 0.0
    %1248 = vmatpush1.msra.mxu0 0.0
    %1249 = vmatprep.subr.mxu0 0.0
    %1250 = vmatpush1.msra.mxu0 0.0
    %1251 = vmatprep.subr.mxu0 0.0
    %1252 = vmatpush1.msra.mxu0 0.0
    %1253 = vmatprep.subr.mxu0 0.0
    %1254 = vmatpush1.msra.mxu0 0.0
    %1255 = vmatprep.subr.mxu0 0.0
    %1256 = vmatpush1.msra.mxu0 0.0
    %1257 = vmatprep.subr.mxu0 0.0
    %1258 = vmatpush1.msra.mxu0 0.0
    %1259 = vmatprep.subr.mxu0 0.0
    %1260 = vmatpush1.msra.mxu0 0.0
    %1261 = vmatprep.subr.mxu0 0.0
    %1262 = vmatpush1.msra.mxu0 0.0
    %1263 = vmatprep.subr.mxu0 0.0
    %1264 = vmatpush1.msra.mxu0 0.0
    %1265 = vmatprep.subr.mxu0 0.0
    %1266 = vmatpush1.msra.mxu0 0.0
    %1267 = vmatprep.subr.mxu0 0.0
    %1268 = vmatpush1.msra.mxu0 0.0
    %1269 = vmatprep.subr.mxu0 0.0
    %1270 = vmatpush1.msra.mxu0 0.0
    %1271 = vmatprep.subr.mxu0 0.0
    %1272 = vmatpush1.msra.mxu0 0.0
    %1273 = vmatprep.subr.mxu0 0.0
    %1274 = vmatpush1.msra.mxu0 0.0
    %1275 = vmatprep.subr.mxu0 0.0
    %1276 = vmatpush1.msra.mxu0 0.0
    %1277 = vmatprep.mubr.f32.mxu0 0.0
    %v1278 = vand.u32 %v626, 4294901760
    %1279 = vmatmul.mubr.f32.gmra.mrb[0].mxu0 %v1278
    %v1280 = vpop.f32.mrb[0].mxu0
    %v1281 = vadd.f32 %v1194, %v1280
    %v1282 = vpop.f32.mrb[0].mxu0
    %1283 = vdwg.mxu0
    %v1284 = vmul.f32 %v626, %v626
    %1285 = vmatprep.subr.mxu0 0.0
    %v1286 = vand.u32 %v627, 4294901760
    %1287 = vmatpush1.msra.mxu0 %v1286
    %1288 = vmatprep.subr.mxu0 0.0
    %v1289 = vand.u32 %v628, 4294901760
    %1290 = vmatpush1.msra.mxu0 %v1289
    %1291 = vmatprep.subr.mxu0 0.0
    %v1292 = vand.u32 %v629, 4294901760
    %1293 = vmatpush1.msra.mxu0 %v1292
    %1294 = vmatprep.subr.mxu0 0.0
    %v1295 = vand.u32 %v630, 4294901760
    %1296 = vmatpush1.msra.mxu0 %v1295
    %1297 = vmatprep.subr.mxu0 0.0
    %v1298 = vand.u32 %v631, 4294901760
    %1299 = vmatpush1.msra.mxu0 %v1298
    %1300 = vmatprep.subr.mxu0 0.0
    %v1301 = vand.u32 %v632, 4294901760
    %1302 = vmatpush1.msra.mxu0 %v1301
    %1303 = vmatprep.subr.mxu0 0.0
    %v1304 = vand.u32 %v633, 4294901760
    %1305 = vmatpush1.msra.mxu0 %v1304
    %1306 = vmatprep.subr.mxu0 0.0
    %v1307 = vand.u32 %v634, 4294901760
    %1308 = vmatpush1.msra.mxu0 %v1307
    %1309 = vmatprep.subr.mxu0 0.0
    %v1310 = vand.u32 %v635, 4294901760
    %1311 = vmatpush1.msra.mxu0 %v1310
    %1312 = vmatprep.subr.mxu0 0.0
    %v1313 = vand.u32 %v636, 4294901760
    %1314 = vmatpush1.msra.mxu0 %v1313
    %1315 = vmatprep.subr.mxu0 0.0
    %v1316 = vand.u32 %v637, 4294901760
    %1317 = vmatpush1.msra.mxu0 %v1316
    %1318 = vmatprep.subr.mxu0 0.0
    %v1319 = vand.u32 %v638, 4294901760
    %1320 = vmatpush1.msra.mxu0 %v1319
    %1321 = vmatprep.subr.mxu0 0.0
    %v1322 = vand.u32 %v639, 4294901760
    %1323 = vmatpush1.msra.mxu0 %v1322
    %1324 = vmatprep.subr.mxu0 0.0
    %v1325 = vand.u32 %v640, 4294901760
    %1326 = vmatpush1.msra.mxu0 %v1325
    %1327 = vmatprep.subr.mxu0 0.0
    %v1328 = vand.u32 %v641, 4294901760
    %1329 = vmatpush1.msra.mxu0 %v1328
    %1330 = vmatprep.subr.mxu0 0.0
    %v1331 = vand.u32 %v642, 4294901760
    %1332 = vmatpush1.msra.mxu0 %v1331
    %1333 = vmatprep.subr.mxu0 0.0
    %1334 = vmatpush1.msra.mxu0 0.0
    %1335 = vmatprep.subr.mxu0 0.0
    %1336 = vmatpush1.msra.mxu0 0.0
    %1337 = vmatprep.subr.mxu0 0.0
    %1338 = vmatpush1.msra.mxu0 0.0
    %1339 = vmatprep.subr.mxu0 0.0
    %1340 = vmatpush1.msra.mxu0 0.0
    %1341 = vmatprep.subr.mxu0 0.0
    %1342 = vmatpush1.msra.mxu0 0.0
    %1343 = vmatprep.subr.mxu0 0.0
    %1344 = vmatpush1.msra.mxu0 0.0
    %1345 = vmatprep.subr.mxu0 0.0
    %1346 = vmatpush1.msra.mxu0 0.0
    %1347 = vmatprep.subr.mxu0 0.0
    %1348 = vmatpush1.msra.mxu0 0.0
    %1349 = vmatprep.subr.mxu0 0.0
    %1350 = vmatpush1.msra.mxu0 0.0
    %1351 = vmatprep.subr.mxu0 0.0
    %1352 = vmatpush1.msra.mxu0 0.0
    %1353 = vmatprep.subr.mxu0 0.0
    %1354 = vmatpush1.msra.mxu0 0.0
    %1355 = vmatprep.subr.mxu0 0.0
    %1356 = vmatpush1.msra.mxu0 0.0
    %1357 = vmatprep.subr.mxu0 0.0
    %1358 = vmatpush1.msra.mxu0 0.0
    %1359 = vmatprep.subr.mxu0 0.0
    %1360 = vmatpush1.msra.mxu0 0.0
    %1361 = vmatprep.subr.mxu0 0.0
    %1362 = vmatpush1.msra.mxu0 0.0
    %1363 = vmatprep.subr.mxu0 0.0
    %1364 = vmatpush1.msra.mxu0 0.0
    %1365 = vmatprep.mubr.f32.mxu0 0.0
    %v1366 = vand.u32 %v1284, 4294901760
    %v1367 = vsub.f32 %v1284, %v1366
    %v1368 = vand.u32 %v1367, 4294901760
    %v1369 = vsub.f32 %v1367, %v1368
    %v1370 = vand.u32 %v1369, 4294901760
    %1371 = vmatmul.mubr.f32.gmra.mrb[0].mxu0 %v1370
    %v1372 = vpop.f32.mrb[0].mxu0
    %v1373 = vadd.f32 0.0, %v1372
    %v1374 = vpop.f32.mrb[0].mxu0
    %1375 = vdwg.mxu0
    %1376 = vmatprep.subr.mxu0 0.0
    %v1377 = vand.u32 %v627, 4294901760
    %v1378 = vsub.f32 %v627, %v1377
    %v1379 = vand.u32 %v1378, 4294901760
    %v1380 = vsub.f32 %v1378, %v1379
    %v1381 = vand.u32 %v1380, 4294901760
    %1382 = vmatpush1.msra.mxu0 %v1381
    %1383 = vmatprep.subr.mxu0 0.0
    %v1384 = vand.u32 %v628, 4294901760
    %v1385 = vsub.f32 %v628, %v1384
    %v1386 = vand.u32 %v1385, 4294901760
    %v1387 = vsub.f32 %v1385, %v1386
    %v1388 = vand.u32 %v1387, 4294901760
    %1389 = vmatpush1.msra.mxu0 %v1388
    %1390 = vmatprep.subr.mxu0 0.0
    %v1391 = vand.u32 %v629, 4294901760
    %v1392 = vsub.f32 %v629, %v1391
    %v1393 = vand.u32 %v1392, 4294901760
    %v1394 = vsub.f32 %v1392, %v1393
    %v1395 = vand.u32 %v1394, 4294901760
    %1396 = vmatpush1.msra.mxu0 %v1395
    %1397 = vmatprep.subr.mxu0 0.0
    %v1398 = vand.u32 %v630, 4294901760
    %v1399 = vsub.f32 %v630, %v1398
    %v1400 = vand.u32 %v1399, 4294901760
    %v1401 = vsub.f32 %v1399, %v1400
    %v1402 = vand.u32 %v1401, 4294901760
    %1403 = vmatpush1.msra.mxu0 %v1402
    %1404 = vmatprep.subr.mxu0 0.0
    %v1405 = vand.u32 %v631, 4294901760
    %v1406 = vsub.f32 %v631, %v1405
    %v1407 = vand.u32 %v1406, 4294901760
    %v1408 = vsub.f32 %v1406, %v1407
    %v1409 = vand.u32 %v1408, 4294901760
    %1410 = vmatpush1.msra.mxu0 %v1409
    %1411 = vmatprep.subr.mxu0 0.0
    %v1412 = vand.u32 %v632, 4294901760
    %v1413 = vsub.f32 %v632, %v1412
    %v1414 = vand.u32 %v1413, 4294901760
    %v1415 = vsub.f32 %v1413, %v1414
    %v1416 = vand.u32 %v1415, 4294901760
    %1417 = vmatpush1.msra.mxu0 %v1416
    %1418 = vmatprep.subr.mxu0 0.0
    %v1419 = vand.u32 %v633, 4294901760
    %v1420 = vsub.f32 %v633, %v1419
    %v1421 = vand.u32 %v1420, 4294901760
    %v1422 = vsub.f32 %v1420, %v1421
    %v1423 = vand.u32 %v1422, 4294901760
    %1424 = vmatpush1.msra.mxu0 %v1423
    %1425 = vmatprep.subr.mxu0 0.0
    %v1426 = vand.u32 %v634, 4294901760
    %v1427 = vsub.f32 %v634, %v1426
    %v1428 = vand.u32 %v1427, 4294901760
    %v1429 = vsub.f32 %v1427, %v1428
    %v1430 = vand.u32 %v1429, 4294901760
    %1431 = vmatpush1.msra.mxu0 %v1430
    %1432 = vmatprep.subr.mxu0 0.0
    %v1433 = vand.u32 %v635, 4294901760
    %v1434 = vsub.f32 %v635, %v1433
    %v1435 = vand.u32 %v1434, 4294901760
    %v1436 = vsub.f32 %v1434, %v1435
    %v1437 = vand.u32 %v1436, 4294901760
    %1438 = vmatpush1.msra.mxu0 %v1437
    %1439 = vmatprep.subr.mxu0 0.0
    %v1440 = vand.u32 %v636, 4294901760
    %v1441 = vsub.f32 %v636, %v1440
    %v1442 = vand.u32 %v1441, 4294901760
    %v1443 = vsub.f32 %v1441, %v1442
    %v1444 = vand.u32 %v1443, 4294901760
    %1445 = vmatpush1.msra.mxu0 %v1444
    %1446 = vmatprep.subr.mxu0 0.0
    %v1447 = vand.u32 %v637, 4294901760
    %v1448 = vsub.f32 %v637, %v1447
    %v1449 = vand.u32 %v1448, 4294901760
    %v1450 = vsub.f32 %v1448, %v1449
    %v1451 = vand.u32 %v1450, 4294901760
    %1452 = vmatpush1.msra.mxu0 %v1451
    %1453 = vmatprep.subr.mxu0 0.0
    %v1454 = vand.u32 %v638, 4294901760
    %v1455 = vsub.f32 %v638, %v1454
    %v1456 = vand.u32 %v1455, 4294901760
    %v1457 = vsub.f32 %v1455, %v1456
    %v1458 = vand.u32 %v1457, 4294901760
    %1459 = vmatpush1.msra.mxu0 %v1458
    %1460 = vmatprep.subr.mxu0 0.0
    %v1461 = vand.u32 %v639, 4294901760
    %v1462 = vsub.f32 %v639, %v1461
    %v1463 = vand.u32 %v1462, 4294901760
    %v1464 = vsub.f32 %v1462, %v1463
    %v1465 = vand.u32 %v1464, 4294901760
    %1466 = vmatpush1.msra.mxu0 %v1465
    %1467 = vmatprep.subr.mxu0 0.0
    %v1468 = vand.u32 %v640, 4294901760
    %v1469 = vsub.f32 %v640, %v1468
    %v1470 = vand.u32 %v1469, 4294901760
    %v1471 = vsub.f32 %v1469, %v1470
    %v1472 = vand.u32 %v1471, 4294901760
    %1473 = vmatpush1.msra.mxu0 %v1472
    %1474 = vmatprep.subr.mxu0 0.0
    %v1475 = vand.u32 %v641, 4294901760
    %v1476 = vsub.f32 %v641, %v1475
    %v1477 = vand.u32 %v1476, 4294901760
    %v1478 = vsub.f32 %v1476, %v1477
    %v1479 = vand.u32 %v1478, 4294901760
    %1480 = vmatpush1.msra.mxu0 %v1479
    %1481 = vmatprep.subr.mxu0 0.0
    %v1482 = vand.u32 %v642, 4294901760
    %v1483 = vsub.f32 %v642, %v1482
    %v1484 = vand.u32 %v1483, 4294901760
    %v1485 = vsub.f32 %v1483, %v1484
    %v1486 = vand.u32 %v1485, 4294901760
    %1487 = vmatpush1.msra.mxu0 %v1486
    %1488 = vmatprep.subr.mxu0 0.0
    %1489 = vmatpush1.msra.mxu0 0.0
    %1490 = vmatprep.subr.mxu0 0.0
    %1491 = vmatpush1.msra.mxu0 0.0
    %1492 = vmatprep.subr.mxu0 0.0
    %1493 = vmatpush1.msra.mxu0 0.0
    %1494 = vmatprep.subr.mxu0 0.0
    %1495 = vmatpush1.msra.mxu0 0.0
    %1496 = vmatprep.subr.mxu0 0.0
    %1497 = vmatpush1.msra.mxu0 0.0
    %1498 = vmatprep.subr.mxu0 0.0
    %1499 = vmatpush1.msra.mxu0 0.0
    %1500 = vmatprep.subr.mxu0 0.0
    %1501 = vmatpush1.msra.mxu0 0.0
    %1502 = vmatprep.subr.mxu0 0.0
    %1503 = vmatpush1.msra.mxu0 0.0
    %1504 = vmatprep.subr.mxu0 0.0
    %1505 = vmatpush1.msra.mxu0 0.0
    %1506 = vmatprep.subr.mxu0 0.0
    %1507 = vmatpush1.msra.mxu0 0.0
    %1508 = vmatprep.subr.mxu0 0.0
    %1509 = vmatpush1.msra.mxu0 0.0
    %1510 = vmatprep.subr.mxu0 0.0
    %1511 = vmatpush1.msra.mxu0 0.0
    %1512 = vmatprep.subr.mxu0 0.0
    %1513 = vmatpush1.msra.mxu0 0.0
    %1514 = vmatprep.subr.mxu0 0.0
    %1515 = vmatpush1.msra.mxu0 0.0
    %1516 = vmatprep.subr.mxu0 0.0
    %1517 = vmatpush1.msra.mxu0 0.0
    %1518 = vmatprep.subr.mxu0 0.0
    %1519 = vmatpush1.msra.mxu0 0.0
    %1520 = vmatprep.mubr.f32.mxu0 0.0
    %v1521 = vand.u32 %v1284, 4294901760
    %1522 = vmatmul.mubr.f32.gmra.mrb[0].mxu0 %v1521
    %v1523 = vpop.f32.mrb[0].mxu0
    %v1524 = vadd.f32 %v1373, %v1523
    %v1525 = vpop.f32.mrb[0].mxu0
    %1526 = vdwg.mxu0
    %1527 = vmatprep.subr.mxu0 0.0
    %v1528 = vand.u32 %v627, 4294901760
    %v1529 = vsub.f32 %v627, %v1528
    %1530 = vmatpush1.msra.mxu0 %v1529
    %1531 = vmatprep.subr.mxu0 0.0
    %v1532 = vand.u32 %v628, 4294901760
    %v1533 = vsub.f32 %v628, %v1532
    %1534 = vmatpush1.msra.mxu0 %v1533
    %1535 = vmatprep.subr.mxu0 0.0
    %v1536 = vand.u32 %v629, 4294901760
    %v1537 = vsub.f32 %v629, %v1536
    %1538 = vmatpush1.msra.mxu0 %v1537
    %1539 = vmatprep.subr.mxu0 0.0
    %v1540 = vand.u32 %v630, 4294901760
    %v1541 = vsub.f32 %v630, %v1540
    %1542 = vmatpush1.msra.mxu0 %v1541
    %1543 = vmatprep.subr.mxu0 0.0
    %v1544 = vand.u32 %v631, 4294901760
    %v1545 = vsub.f32 %v631, %v1544
    %1546 = vmatpush1.msra.mxu0 %v1545
    %1547 = vmatprep.subr.mxu0 0.0
    %v1548 = vand.u32 %v632, 4294901760
    %v1549 = vsub.f32 %v632, %v1548
    %1550 = vmatpush1.msra.mxu0 %v1549
    %1551 = vmatprep.subr.mxu0 0.0
    %v1552 = vand.u32 %v633, 4294901760
    %v1553 = vsub.f32 %v633, %v1552
    %1554 = vmatpush1.msra.mxu0 %v1553
    %1555 = vmatprep.subr.mxu0 0.0
    %v1556 = vand.u32 %v634, 4294901760
    %v1557 = vsub.f32 %v634, %v1556
    %1558 = vmatpush1.msra.mxu0 %v1557
    %1559 = vmatprep.subr.mxu0 0.0
    %v1560 = vand.u32 %v635, 4294901760
    %v1561 = vsub.f32 %v635, %v1560
    %1562 = vmatpush1.msra.mxu0 %v1561
    %1563 = vmatprep.subr.mxu0 0.0
    %v1564 = vand.u32 %v636, 4294901760
    %v1565 = vsub.f32 %v636, %v1564
    %1566 = vmatpush1.msra.mxu0 %v1565
    %1567 = vmatprep.subr.mxu0 0.0
    %v1568 = vand.u32 %v637, 4294901760
    %v1569 = vsub.f32 %v637, %v1568
    %1570 = vmatpush1.msra.mxu0 %v1569
    %1571 = vmatprep.subr.mxu0 0.0
    %v1572 = vand.u32 %v638, 4294901760
    %v1573 = vsub.f32 %v638, %v1572
    %1574 = vmatpush1.msra.mxu0 %v1573
    %1575 = vmatprep.subr.mxu0 0.0
    %v1576 = vand.u32 %v639, 4294901760
    %v1577 = vsub.f32 %v639, %v1576
    %1578 = vmatpush1.msra.mxu0 %v1577
    %1579 = vmatprep.subr.mxu0 0.0
    %v1580 = vand.u32 %v640, 4294901760
    %v1581 = vsub.f32 %v640, %v1580
    %1582 = vmatpush1.msra.mxu0 %v1581
    %1583 = vmatprep.subr.mxu0 0.0
    %v1584 = vand.u32 %v641, 4294901760
    %v1585 = vsub.f32 %v641, %v1584
    %1586 = vmatpush1.msra.mxu0 %v1585
    %1587 = vmatprep.subr.mxu0 0.0
    %v1588 = vand.u32 %v642, 4294901760
    %v1589 = vsub.f32 %v642, %v1588
    %1590 = vmatpush1.msra.mxu0 %v1589
    %1591 = vmatprep.subr.mxu0 0.0
    %1592 = vmatpush1.msra.mxu0 0.0
    %1593 = vmatprep.subr.mxu0 0.0
    %1594 = vmatpush1.msra.mxu0 0.0
    %1595 = vmatprep.subr.mxu0 0.0
    %1596 = vmatpush1.msra.mxu0 0.0
    %1597 = vmatprep.subr.mxu0 0.0
    %1598 = vmatpush1.msra.mxu0 0.0
    %1599 = vmatprep.subr.mxu0 0.0
    %1600 = vmatpush1.msra.mxu0 0.0
    %1601 = vmatprep.subr.mxu0 0.0
    %1602 = vmatpush1.msra.mxu0 0.0
    %1603 = vmatprep.subr.mxu0 0.0
    %1604 = vmatpush1.msra.mxu0 0.0
    %1605 = vmatprep.subr.mxu0 0.0
    %1606 = vmatpush1.msra.mxu0 0.0
    %1607 = vmatprep.subr.mxu0 0.0
    %1608 = vmatpush1.msra.mxu0 0.0
    %1609 = vmatprep.subr.mxu0 0.0
    %1610 = vmatpush1.msra.mxu0 0.0
    %1611 = vmatprep.subr.mxu0 0.0
    %1612 = vmatpush1.msra.mxu0 0.0
    %1613 = vmatprep.subr.mxu0 0.0
    %1614 = vmatpush1.msra.mxu0 0.0
    %1615 = vmatprep.subr.mxu0 0.0
    %1616 = vmatpush1.msra.mxu0 0.0
    %1617 = vmatprep.subr.mxu0 0.0
    %1618 = vmatpush1.msra.mxu0 0.0
    %1619 = vmatprep.subr.mxu0 0.0
    %1620 = vmatpush1.msra.mxu0 0.0
    %1621 = vmatprep.subr.mxu0 0.0
    %1622 = vmatpush1.msra.mxu0 0.0
    %1623 = vmatprep.mubr.f32.mxu0 0.0
    %v1624 = vand.u32 %v1284, 4294901760
    %v1625 = vsub.f32 %v1284, %v1624
    %1626 = vmatmul.mubr.f32.gmra.mrb[0].mxu0 %v1625
    %v1627 = vpop.f32.mrb[0].mxu0
    %v1628 = vadd.f32 %v1524, %v1627
    %v1629 = vpop.f32.mrb[0].mxu0
    %1630 = vdwg.mxu0
    %1631 = vmatprep.subr.mxu0 0.0
    %v1632 = vand.u32 %v627, 4294901760
    %1633 = vmatpush1.msra.mxu0 %v1632
    %1634 = vmatprep.subr.mxu0 0.0
    %v1635 = vand.u32 %v628, 4294901760
    %1636 = vmatpush1.msra.mxu0 %v1635
    %1637 = vmatprep.subr.mxu0 0.0
    %v1638 = vand.u32 %v629, 4294901760
    %1639 = vmatpush1.msra.mxu0 %v1638
    %1640 = vmatprep.subr.mxu0 0.0
    %v1641 = vand.u32 %v630, 4294901760
    %1642 = vmatpush1.msra.mxu0 %v1641
    %1643 = vmatprep.subr.mxu0 0.0
    %v1644 = vand.u32 %v631, 4294901760
    %1645 = vmatpush1.msra.mxu0 %v1644
    %1646 = vmatprep.subr.mxu0 0.0
    %v1647 = vand.u32 %v632, 4294901760
    %1648 = vmatpush1.msra.mxu0 %v1647
    %1649 = vmatprep.subr.mxu0 0.0
    %v1650 = vand.u32 %v633, 4294901760
    %1651 = vmatpush1.msra.mxu0 %v1650
    %1652 = vmatprep.subr.mxu0 0.0
    %v1653 = vand.u32 %v634, 4294901760
    %1654 = vmatpush1.msra.mxu0 %v1653
    %1655 = vmatprep.subr.mxu0 0.0
    %v1656 = vand.u32 %v635, 4294901760
    %1657 = vmatpush1.msra.mxu0 %v1656
    %1658 = vmatprep.subr.mxu0 0.0
    %v1659 = vand.u32 %v636, 4294901760
    %1660 = vmatpush1.msra.mxu0 %v1659
    %1661 = vmatprep.subr.mxu0 0.0
    %v1662 = vand.u32 %v637, 4294901760
    %1663 = vmatpush1.msra.mxu0 %v1662
    %1664 = vmatprep.subr.mxu0 0.0
    %v1665 = vand.u32 %v638, 4294901760
    %1666 = vmatpush1.msra.mxu0 %v1665
    %1667 = vmatprep.subr.mxu0 0.0
    %v1668 = vand.u32 %v639, 4294901760
    %1669 = vmatpush1.msra.mxu0 %v1668
    %1670 = vmatprep.subr.mxu0 0.0
    %v1671 = vand.u32 %v640, 4294901760
    %1672 = vmatpush1.msra.mxu0 %v1671
    %1673 = vmatprep.subr.mxu0 0.0
    %v1674 = vand.u32 %v641, 4294901760
    %1675 = vmatpush1.msra.mxu0 %v1674
    %1676 = vmatprep.subr.mxu0 0.0
    %v1677 = vand.u32 %v642, 4294901760
    %1678 = vmatpush1.msra.mxu0 %v1677
    %1679 = vmatprep.subr.mxu0 0.0
    %1680 = vmatpush1.msra.mxu0 0.0
    %1681 = vmatprep.subr.mxu0 0.0
    %1682 = vmatpush1.msra.mxu0 0.0
    %1683 = vmatprep.subr.mxu0 0.0
    %1684 = vmatpush1.msra.mxu0 0.0
    %1685 = vmatprep.subr.mxu0 0.0
    %1686 = vmatpush1.msra.mxu0 0.0
    %1687 = vmatprep.subr.mxu0 0.0
    %1688 = vmatpush1.msra.mxu0 0.0
    %1689 = vmatprep.subr.mxu0 0.0
    %1690 = vmatpush1.msra.mxu0 0.0
    %1691 = vmatprep.subr.mxu0 0.0
    %1692 = vmatpush1.msra.mxu0 0.0
    %1693 = vmatprep.subr.mxu0 0.0
    %1694 = vmatpush1.msra.mxu0 0.0
    %1695 = vmatprep.subr.mxu0 0.0
    %1696 = vmatpush1.msra.mxu0 0.0
    %1697 = vmatprep.subr.mxu0 0.0
    %1698 = vmatpush1.msra.mxu0 0.0
    %1699 = vmatprep.subr.mxu0 0.0
    %1700 = vmatpush1.msra.mxu0 0.0
    %1701 = vmatprep.subr.mxu0 0.0
    %1702 = vmatpush1.msra.mxu0 0.0
    %1703 = vmatprep.subr.mxu0 0.0
    %1704 = vmatpush1.msra.mxu0 0.0
    %1705 = vmatprep.subr.mxu0 0.0
    %1706 = vmatpush1.msra.mxu0 0.0
    %1707 = vmatprep.subr.mxu0 0.0
    %1708 = vmatpush1.msra.mxu0 0.0
    %1709 = vmatprep.subr.mxu0 0.0
    %1710 = vmatpush1.msra.mxu0 0.0
    %1711 = vmatprep.mubr.f32.mxu0 0.0
    %v1712 = vand.u32 %v1284, 4294901760
    %v1713 = vsub.f32 %v1284, %v1712
    %v1714 = vand.u32 %v1713, 4294901760
    %1715 = vmatmul.mubr.f32.gmra.mrb[0].mxu0 %v1714
    %v1716 = vpop.f32.mrb[0].mxu0
    %v1717 = vadd.f32 %v1628, %v1716
    %v1718 = vpop.f32.mrb[0].mxu0
    %1719 = vdwg.mxu0
    %1720 = vmatprep.subr.mxu0 0.0
    %v1721 = vand.u32 %v627, 4294901760
    %v1722 = vsub.f32 %v627, %v1721
    %v1723 = vand.u32 %v1722, 4294901760
    %1724 = vmatpush1.msra.mxu0 %v1723
    %1725 = vmatprep.subr.mxu0 0.0
    %v1726 = vand.u32 %v628, 4294901760
    %v1727 = vsub.f32 %v628, %v1726
    %v1728 = vand.u32 %v1727, 4294901760
    %1729 = vmatpush1.msra.mxu0 %v1728
    %1730 = vmatprep.subr.mxu0 0.0
    %v1731 = vand.u32 %v629, 4294901760
    %v1732 = vsub.f32 %v629, %v1731
    %v1733 = vand.u32 %v1732, 4294901760
    %1734 = vmatpush1.msra.mxu0 %v1733
    %1735 = vmatprep.subr.mxu0 0.0
    %v1736 = vand.u32 %v630, 4294901760
    %v1737 = vsub.f32 %v630, %v1736
    %v1738 = vand.u32 %v1737, 4294901760
    %1739 = vmatpush1.msra.mxu0 %v1738
    %1740 = vmatprep.subr.mxu0 0.0
    %v1741 = vand.u32 %v631, 4294901760
    %v1742 = vsub.f32 %v631, %v1741
    %v1743 = vand.u32 %v1742, 4294901760
    %1744 = vmatpush1.msra.mxu0 %v1743
    %1745 = vmatprep.subr.mxu0 0.0
    %v1746 = vand.u32 %v632, 4294901760
    %v1747 = vsub.f32 %v632, %v1746
    %v1748 = vand.u32 %v1747, 4294901760
    %1749 = vmatpush1.msra.mxu0 %v1748
    %1750 = vmatprep.subr.mxu0 0.0
    %v1751 = vand.u32 %v633, 4294901760
    %v1752 = vsub.f32 %v633, %v1751
    %v1753 = vand.u32 %v1752, 4294901760
    %1754 = vmatpush1.msra.mxu0 %v1753
    %1755 = vmatprep.subr.mxu0 0.0
    %v1756 = vand.u32 %v634, 4294901760
    %v1757 = vsub.f32 %v634, %v1756
    %v1758 = vand.u32 %v1757, 4294901760
    %1759 = vmatpush1.msra.mxu0 %v1758
    %1760 = vmatprep.subr.mxu0 0.0
    %v1761 = vand.u32 %v635, 4294901760
    %v1762 = vsub.f32 %v635, %v1761
    %v1763 = vand.u32 %v1762, 4294901760
    %1764 = vmatpush1.msra.mxu0 %v1763
    %1765 = vmatprep.subr.mxu0 0.0
    %v1766 = vand.u32 %v636, 4294901760
    %v1767 = vsub.f32 %v636, %v1766
    %v1768 = vand.u32 %v1767, 4294901760
    %1769 = vmatpush1.msra.mxu0 %v1768
    %1770 = vmatprep.subr.mxu0 0.0
    %v1771 = vand.u32 %v637, 4294901760
    %v1772 = vsub.f32 %v637, %v1771
    %v1773 = vand.u32 %v1772, 4294901760
    %1774 = vmatpush1.msra.mxu0 %v1773
    %1775 = vmatprep.subr.mxu0 0.0
    %v1776 = vand.u32 %v638, 4294901760
    %v1777 = vsub.f32 %v638, %v1776
    %v1778 = vand.u32 %v1777, 4294901760
    %1779 = vmatpush1.msra.mxu0 %v1778
    %1780 = vmatprep.subr.mxu0 0.0
    %v1781 = vand.u32 %v639, 4294901760
    %v1782 = vsub.f32 %v639, %v1781
    %v1783 = vand.u32 %v1782, 4294901760
    %1784 = vmatpush1.msra.mxu0 %v1783
    %1785 = vmatprep.subr.mxu0 0.0
    %v1786 = vand.u32 %v640, 4294901760
    %v1787 = vsub.f32 %v640, %v1786
    %v1788 = vand.u32 %v1787, 4294901760
    %1789 = vmatpush1.msra.mxu0 %v1788
    %1790 = vmatprep.subr.mxu0 0.0
    %v1791 = vand.u32 %v641, 4294901760
    %v1792 = vsub.f32 %v641, %v1791
    %v1793 = vand.u32 %v1792, 4294901760
    %1794 = vmatpush1.msra.mxu0 %v1793
    %1795 = vmatprep.subr.mxu0 0.0
    %v1796 = vand.u32 %v642, 4294901760
    %v1797 = vsub.f32 %v642, %v1796
    %v1798 = vand.u32 %v1797, 4294901760
    %1799 = vmatpush1.msra.mxu0 %v1798
    %1800 = vmatprep.subr.mxu0 0.0
    %1801 = vmatpush1.msra.mxu0 0.0
    %1802 = vmatprep.subr.mxu0 0.0
    %1803 = vmatpush1.msra.mxu0 0.0
    %1804 = vmatprep.subr.mxu0 0.0
    %1805 = vmatpush1.msra.mxu0 0.0
    %1806 = vmatprep.subr.mxu0 0.0
    %1807 = vmatpush1.msra.mxu0 0.0
    %1808 = vmatprep.subr.mxu0 0.0
    %1809 = vmatpush1.msra.mxu0 0.0
    %1810 = vmatprep.subr.mxu0 0.0
    %1811 = vmatpush1.msra.mxu0 0.0
    %1812 = vmatprep.subr.mxu0 0.0
    %1813 = vmatpush1.msra.mxu0 0.0
    %1814 = vmatprep.subr.mxu0 0.0
    %1815 = vmatpush1.msra.mxu0 0.0
    %1816 = vmatprep.subr.mxu0 0.0
    %1817 = vmatpush1.msra.mxu0 0.0
    %1818 = vmatprep.subr.mxu0 0.0
    %1819 = vmatpush1.msra.mxu0 0.0
    %1820 = vmatprep.subr.mxu0 0.0
    %1821 = vmatpush1.msra.mxu0 0.0
    %1822 = vmatprep.subr.mxu0 0.0
    %1823 = vmatpush1.msra.mxu0 0.0
    %1824 = vmatprep.subr.mxu0 0.0
    %1825 = vmatpush1.msra.mxu0 0.0
    %1826 = vmatprep.subr.mxu0 0.0
    %1827 = vmatpush1.msra.mxu0 0.0
    %1828 = vmatprep.subr.mxu0 0.0
    %1829 = vmatpush1.msra.mxu0 0.0
    %1830 = vmatprep.subr.mxu0 0.0
    %1831 = vmatpush1.msra.mxu0 0.0
    %1832 = vmatprep.mubr.f32.mxu0 0.0
    %v1833 = vand.u32 %v1284, 4294901760
    %1834 = vmatmul.mubr.f32.gmra.mrb[0].mxu0 %v1833
    %v1835 = vpop.f32.mrb[0].mxu0
    %v1836 = vadd.f32 %v1717, %v1835
    %v1837 = vpop.f32.mrb[0].mxu0
    %1838 = vdwg.mxu0
    %1839 = vmatprep.subr.mxu0 0.0
    %v1840 = vand.u32 %v627, 4294901760
    %1841 = vmatpush1.msra.mxu0 %v1840
    %1842 = vmatprep.subr.mxu0 0.0
    %v1843 = vand.u32 %v628, 4294901760
    %1844 = vmatpush1.msra.mxu0 %v1843
    %1845 = vmatprep.subr.mxu0 0.0
    %v1846 = vand.u32 %v629, 4294901760
    %1847 = vmatpush1.msra.mxu0 %v1846
    %1848 = vmatprep.subr.mxu0 0.0
    %v1849 = vand.u32 %v630, 4294901760
    %1850 = vmatpush1.msra.mxu0 %v1849
    %1851 = vmatprep.subr.mxu0 0.0
    %v1852 = vand.u32 %v631, 4294901760
    %1853 = vmatpush1.msra.mxu0 %v1852
    %1854 = vmatprep.subr.mxu0 0.0
    %v1855 = vand.u32 %v632, 4294901760
    %1856 = vmatpush1.msra.mxu0 %v1855
    %1857 = vmatprep.subr.mxu0 0.0
    %v1858 = vand.u32 %v633, 4294901760
    %1859 = vmatpush1.msra.mxu0 %v1858
    %1860 = vmatprep.subr.mxu0 0.0
    %v1861 = vand.u32 %v634, 4294901760
    %1862 = vmatpush1.msra.mxu0 %v1861
    %1863 = vmatprep.subr.mxu0 0.0
    %v1864 = vand.u32 %v635, 4294901760
    %1865 = vmatpush1.msra.mxu0 %v1864
    %1866 = vmatprep.subr.mxu0 0.0
    %v1867 = vand.u32 %v636, 4294901760
    %1868 = vmatpush1.msra.mxu0 %v1867
    %1869 = vmatprep.subr.mxu0 0.0
    %v1870 = vand.u32 %v637, 4294901760
    %1871 = vmatpush1.msra.mxu0 %v1870
    %1872 = vmatprep.subr.mxu0 0.0
    %v1873 = vand.u32 %v638, 4294901760
    %1874 = vmatpush1.msra.mxu0 %v1873
    %1875 = vmatprep.subr.mxu0 0.0
    %v1876 = vand.u32 %v639, 4294901760
    %1877 = vmatpush1.msra.mxu0 %v1876
    %1878 = vmatprep.subr.mxu0 0.0
    %v1879 = vand.u32 %v640, 4294901760
    %1880 = vmatpush1.msra.mxu0 %v1879
    %1881 = vmatprep.subr.mxu0 0.0
    %v1882 = vand.u32 %v641, 4294901760
    %1883 = vmatpush1.msra.mxu0 %v1882
    %1884 = vmatprep.subr.mxu0 0.0
    %v1885 = vand.u32 %v642, 4294901760
    %1886 = vmatpush1.msra.mxu0 %v1885
    %1887 = vmatprep.subr.mxu0 0.0
    %1888 = vmatpush1.msra.mxu0 0.0
    %1889 = vmatprep.subr.mxu0 0.0
    %1890 = vmatpush1.msra.mxu0 0.0
    %1891 = vmatprep.subr.mxu0 0.0
    %1892 = vmatpush1.msra.mxu0 0.0
    %1893 = vmatprep.subr.mxu0 0.0
    %1894 = vmatpush1.msra.mxu0 0.0
    %1895 = vmatprep.subr.mxu0 0.0
    %1896 = vmatpush1.msra.mxu0 0.0
    %1897 = vmatprep.subr.mxu0 0.0
    %1898 = vmatpush1.msra.mxu0 0.0
    %1899 = vmatprep.subr.mxu0 0.0
    %1900 = vmatpush1.msra.mxu0 0.0
    %1901 = vmatprep.subr.mxu0 0.0
    %1902 = vmatpush1.msra.mxu0 0.0
    %1903 = vmatprep.subr.mxu0 0.0
    %1904 = vmatpush1.msra.mxu0 0.0
    %1905 = vmatprep.subr.mxu0 0.0
    %1906 = vmatpush1.msra.mxu0 0.0
    %1907 = vmatprep.subr.mxu0 0.0
    %1908 = vmatpush1.msra.mxu0 0.0
    %1909 = vmatprep.subr.mxu0 0.0
    %1910 = vmatpush1.msra.mxu0 0.0
    %1911 = vmatprep.subr.mxu0 0.0
    %1912 = vmatpush1.msra.mxu0 0.0
    %1913 = vmatprep.subr.mxu0 0.0
    %1914 = vmatpush1.msra.mxu0 0.0
    %1915 = vmatprep.subr.mxu0 0.0
    %1916 = vmatpush1.msra.mxu0 0.0
    %1917 = vmatprep.subr.mxu0 0.0
    %1918 = vmatpush1.msra.mxu0 0.0
    %1919 = vmatprep.mubr.f32.mxu0 0.0
    %v1920 = vand.u32 %v1284, 4294901760
    %1921 = vmatmul.mubr.f32.gmra.mrb[0].mxu0 %v1920
    %v1922 = vpop.f32.mrb[0].mxu0
    %v1923 = vadd.f32 %v1836, %v1922
    %v1924 = vpop.f32.mrb[0].mxu0
    %1925 = vdwg.mxu0
    %v1926 = vmul.f32 %v1281, %v1281
    %v1927 = vsub.f32 %v1923, %v1926
    %v1928 = vmax.f32 %v1927, 0.0
    %v1929 = vsub.f32 %v626, %v1281
    %v1930 = vadd.f32 %v1928, 1e-05
    %v1931 = vrsqrt.pop %v1930
    %v1932 = vmul.f32 %v1929, %v1931
    %v1933 = vld [vmem:[%s4] sm:$0x1]
    %v1935 = vlaneseq
    %v1936 = vshrl.u32 %v1935, 7
    %v1937 = vsub.s32 0, %v1936
    %v1938 = vrot.slane %v1933, %v1937
    %v1940 = vmul.f32 %v1932, %v1938
    %v1941 = vld [vmem:[%s5] sm:$0x1]
    %v1943 = vlaneseq
    %v1944 = vshrl.u32 %v1943, 7
    %v1945 = vsub.s32 0, %v1944
    %v1946 = vrot.slane %v1941, %v1945
    %v1948 = vadd.f32 %v1940, %v1946
    %1949 = vst [vmem:[#allocation10] sm:$0xf] %v1948
    // Predicated region
    $region42: #{tpu_custom_call.1} parent=1 // pred_check
      _
    $region43: #{tpu_custom_call.1} parent=1 // pred_check_branch
      %1951 = sbr.rel (0) target = $region45
    $region44: #{tpu_custom_call.1} parent=1 // pred_region
      %s1953 = ssub.s32 64, 64
      %1954 = vsyncadd [#allocation4], %s1953
      %s1956 = sshll.u32 [#allocation10], 4
      %s1957 = int_to_ptr.vmem [resolvable:$true] %s1956
      %1959 = dma.vmem_to_hbm [thread:$0]  %s1957, 64, %s6, [#allocation4]
    $region45: #{tpu_custom_call.1} parent=1 // pred_fallthru
      _
    // Predicated region
    $region46: #{tpu_custom_call.1} parent=1 // pred_check
      _
    $region47: #{tpu_custom_call.1} parent=1 // pred_check_branch
      %1961 = sbr.rel (0) target = $region49
    $region48: #{tpu_custom_call.1} parent=1 // pred_region
      %1962 = dma.done [#allocation4], 64
    $region49: #{tpu_custom_call.1} parent=1 // pred_fallthru
      _
    %1963 = vsyncpa [#allocation3], 1
    %1964 = vsyncpa [#allocation6], 1
    %1965 = vsyncpa [#allocation9], 1
    %1966 = vsyncpa [#allocation4], 1

</llo_original>
